<compile_context>
chip_gen: v6e
topology: v6e:2x2x1
jax: 0.10.0
libtpu: 0.0.40
codegen_flags: <defaults>
</compile_context>

<pallas_src>
import functools
import math

import jax
import jax.numpy as jnp
from jax import lax
from jax.experimental import pallas as pl
from jax.experimental.pallas import tpu as pltpu


# ----------------------------------------------------------------------------
# Small helpers
# ----------------------------------------------------------------------------

def _vmem_limit():
    """~3/4 of physical VMEM (96 MiB on v5e/v6e, 48 MiB on v7x)."""
    try:
        cap = int(pltpu.get_tpu_info().vmem_capacity_bytes)
        return max(32 * 1024 * 1024, (cap * 3) // 4)
    except Exception:
        return 48 * 1024 * 1024


def _compiler_params():
    return pltpu.CompilerParams(
        dimension_semantics=("parallel", "parallel"),
        vmem_limit_bytes=_vmem_limit())


def _bn_fold(gamma, beta, mean, var, eps):
    """Fold inference-mode BatchNorm into per-channel (scale, shift) once."""
    s = gamma / jnp.sqrt(var + eps)
    t = beta - mean * s
    return s.astype(jnp.float32), t.astype(jnp.float32)


def _pick_rows(ho, wo, row_block=None):
    """Largest row tile R dividing Ho with R*Wo a sublane multiple.

    Auto mode aims for an MXU M dimension of ~512 rows per tap matmul.
    """
    target = row_block if row_block is not None else max(1, -(-512 // max(wo, 1)))
    target = max(1, min(ho, int(target)))
    for r in range(target, 0, -1):
        if ho % r == 0 and (r * wo) % 8 == 0:
            return r
    return ho


# ----------------------------------------------------------------------------
# Kernel building blocks
# ----------------------------------------------------------------------------

def _acc_taps_s1(x_ref, w_ref, base, rows, wo):
    """Nine-tap 3x3 accumulation, stride 1.

    x_ref: (Hp, Wp, Cin) padded image; returns f32 (rows*wo, Cout).
    Taps are fully unrolled; acc is initialized from the first tap.
    """
    cin = x_ref.shape[-1]
    acc = None
    for dy in range(3):
        xr = x_ref[pl.ds(base + dy, rows), :, :]               # (rows, Wp, Cin)
        for dx in range(3):
            xs = xr[:, dx:dx + wo, :].reshape(rows * wo, cin)
            d = jnp.dot(xs, w_ref[dy, dx],
                        preferred_element_type=jnp.float32)
            acc = d if acc is None else acc + d
    return acc


def _acc_taps_s2(xe_ref, xo_ref, w_ref, base, rows, wo):
    """Nine-tap 3x3 accumulation, stride 2, from even/odd-row width-tap views.

    xe_ref / xo_ref: (3, H_par, Wo, Cin); returns f32 (rows*wo, Cout).
    Output row ho reads padded rows 2*ho+dy -> dy=0: even[ho], dy=1: odd[ho],
    dy=2: even[ho+1], so every tap is a contiguous (rows, Wo, Cin) block.
    """
    cin = xe_ref.shape[-1]
    planes = ((xe_ref, 0), (xo_ref, 0), (xe_ref, 1))
    acc = None
    for dy in range(3):
        src, off = planes[dy]
        for dx in range(3):
            xs = src[dx, pl.ds(base + off, rows), :, :]        # (rows, Wo, Cin)
            xs = xs.reshape(rows * wo, cin)
            d = jnp.dot(xs, w_ref[dy, dx],
                        preferred_element_type=jnp.float32)
            acc = d if acc is None else acc + d
    return acc


def _finish_bn_add(acc, s_ref, t_ref, rest, project):
    """BN2 affine on the f32 accumulator + fused shortcut add, then store."""
    out = acc * s_ref[...] + t_ref[...]
    if project:
        # Shortcut = BN_sc(Conv1x1(x_sub)): one extra MXU dot on the f32 acc.
        xsc_ref, wsc_ref, ssc_ref, tsc_ref, o_ref = rest
        sc = jnp.dot(xsc_ref[...], wsc_ref[...],
                     preferred_element_type=jnp.float32)
        out = out + (sc * ssc_ref[...] + tsc_ref[...])
    else:
        # Shortcut = MaxPool(1, stride)(x) == strided subsample of x.
        res_ref, o_ref = rest
        out = out + res_ref[...].astype(jnp.float32)
    o_ref[...] = out.astype(o_ref.dtype)


def _conv3x3_s1_prelu_kernel(x_ref, w_ref, b_ref, a_ref, o_ref, *, rows, wo):
    """conv1: 3x3 stride-1 conv (BN1 folded) + constant bias + fused PReLU."""
    base = pl.program_id(1) * rows
    acc = _acc_taps_s1(x_ref, w_ref, base, rows, wo) + b_ref[...]
    o_ref[...] = jnp.where(acc > 0, acc, acc * a_ref[...]).astype(o_ref.dtype)


def _conv3x3_s1_bn_add_kernel(x_ref, w_ref, s_ref, t_ref, *rest,
                              rows, wo, project):
    """conv2 (stride 1) + BN2 affine + fused shortcut add."""
    base = pl.program_id(1) * rows
    acc = _acc_taps_s1(x_ref, w_ref, base, rows, wo)
    _finish_bn_add(acc, s_ref, t_ref, rest, project)


def _conv3x3_s2_bn_add_kernel(xe_ref, xo_ref, w_ref, s_ref, t_ref, *rest,
                              rows, wo, project):
    """conv2 (stride 2) + BN2 affine + fused shortcut add."""
    base = pl.program_id(1) * rows
    acc = _acc_taps_s2(xe_ref, xo_ref, w_ref, base, rows, wo)
    _finish_bn_add(acc, s_ref, t_ref, rest, project)


# ----------------------------------------------------------------------------
# pallas_call wrappers
# ----------------------------------------------------------------------------

def _conv3x3_prelu(xp, w_scaled, bias, alpha, *, row_block=None):
    """3x3 stride-1 conv over a pre-padded image; output (N, H*W, Cout)."""
    n, hp, wp, cin = xp.shape
    cout = w_scaled.shape[-1]
    ho, wo = hp - 2, wp - 2
    rows = _pick_rows(ho, wo, row_block)
    kernel = functools.partial(_conv3x3_s1_prelu_kernel, rows=rows, wo=wo)
    return pl.pallas_call(
        kernel,
        out_shape=jax.ShapeDtypeStruct((n, ho * wo, cout), xp.dtype),
        grid_spec=pltpu.PrefetchScalarGridSpec(
            num_scalar_prefetch=0,
            grid=(n, ho // rows),
            in_specs=[
                # Whole padded image per batch; re-DMA'd only when b changes.
                pl.BlockSpec((None, hp, wp, cin), lambda b, r: (b, 0, 0, 0)),
                pl.BlockSpec((3, 3, cin, cout), lambda b, r: (0, 0, 0, 0)),
                pl.BlockSpec((1, cout), lambda b, r: (0, 0)),
                pl.BlockSpec((1, cout), lambda b, r: (0, 0)),
            ],
            out_specs=pl.BlockSpec((None, rows * wo, cout),
                                   lambda b, r: (b, r, 0)),
        ),
        compiler_params=_compiler_params(),
    )(xp, w_scaled,
      bias.reshape(1, cout).astype(jnp.float32),
      alpha.reshape(1, cout).astype(jnp.float32))


def _conv3x3_bn_add(h1, sc_flat, w2, s2, t2, *, stride, sc_w=None, sc_s=None,
                    sc_t=None, row_block=None):
    """3x3 conv (given stride) + BN2 + fused shortcut; output (N, Ho*Wo, Cout)."""
    n, h, w, c = h1.shape
    cout = w2.shape[-1]
    ho = (h - 1) // stride + 1
    wo = (w - 1) // stride + 1
    rows = _pick_rows(ho, wo, row_block)
    project = sc_w is not None

    h1p = jnp.pad(h1, ((0, 0), (1, 1), (1, 1), (0, 0)))        # zero pad (exact)

    w_spec = pl.BlockSpec((3, 3, c, cout), lambda b, r: (0, 0, 0, 0))
    vec_spec = pl.BlockSpec((1, cout), lambda b, r: (0, 0))

    if project:
        cin_sc = sc_flat.shape[-1]
        sc_inputs = [sc_flat, sc_w,
                     sc_s.reshape(1, cout).astype(jnp.float32),
                     sc_t.reshape(1, cout).astype(jnp.float32)]
        sc_specs = [
            pl.BlockSpec((None, rows * wo, cin_sc), lambda b, r: (b, r, 0)),
            pl.BlockSpec((cin_sc, cout), lambda b, r: (0, 0)),
            vec_spec, vec_spec,
        ]
    else:
        sc_inputs = [sc_flat]
        sc_specs = [pl.BlockSpec((None, rows * wo, cout),
                                 lambda b, r: (b, r, 0))]

    if stride == 1:
        kernel = functools.partial(_conv3x3_s1_bn_add_kernel,
                                   rows=rows, wo=wo, project=project)
        conv_inputs = [h1p]
        conv_specs = [pl.BlockSpec((None, h + 2, w + 2, c),
                                   lambda b, r: (b, 0, 0, 0))]
    else:
        # Even/odd-row x width-tap views so strided taps become contiguous
        # (rows, Wo, C) blocks (~1.5x conv2-input footprint).
        # TODO(synk): in-kernel strided loads would avoid materializing these
        # views in HBM entirely.
        def _planes(par):
            v = h1p[:, par::2, :, :]
            vs = jnp.stack([v[:, :, dx::2, :][:, :, :wo, :] for dx in range(3)],
                           axis=1)                         # (N, 3, Hpar, Wo, C)
            return vs.reshape(n * 3, vs.shape[2], wo, c)

        xe, xo = _planes(0), _planes(1)
        kernel = functools.partial(_conv3x3_s2_bn_add_kernel,
                                   rows=rows, wo=wo, project=project)
        conv_inputs = [xe, xo]
        conv_specs = [
            pl.BlockSpec((3, xe.shape[1], wo, c), lambda b, r: (b, 0, 0, 0)),
            pl.BlockSpec((3, xo.shape[1], wo, c), lambda b, r: (b, 0, 0, 0)),
        ]

    return pl.pallas_call(
        kernel,
        out_shape=jax.ShapeDtypeStruct((n, ho * wo, cout), h1.dtype),
        grid_spec=pltpu.PrefetchScalarGridSpec(
            num_scalar_prefetch=0,
            grid=(n, ho // rows),
            in_specs=conv_specs + [w_spec, vec_spec, vec_spec] + sc_specs,
            out_specs=pl.BlockSpec((None, rows * wo, cout),
                                   lambda b, r: (b, r, 0)),
        ),
        compiler_params=_compiler_params(),
    )(*conv_inputs, w2,
      s2.reshape(1, cout).astype(jnp.float32),
      t2.reshape(1, cout).astype(jnp.float32),
      *sc_inputs)


def bottleneck_ir_forward(x_nchw, params, *, stride, eps=1e-5,
                          compute_dtype=jnp.float32, row_block=None):
    """Forward pass of bottleneck_IR (BatchNorms in inference mode).

    compute_dtype=bf16 halves activation/weight HBM traffic; accumulation and
    all epilogues stay in f32.  row_block=None auto-sizes the row tile.
    """
    # TODO(synk): training-mode BatchNorm (batch statistics + running-stat
    # updates) is not implemented; inference-mode BN is folded to affines.
    assert stride in (1, 2)
    n, cin, h, w = x_nchw.shape
    depth = params["conv1_w"].shape[0]
    cdt = compute_dtype

    x = jnp.transpose(x_nchw, (0, 2, 3, 1)).astype(jnp.float32)   # NCHW -> NHWC

    # ---- BN1 folded into conv1: scale -> weights, shift -> constant bias.
    # Padding x with p = -shift/scale reproduces the zero padding of BN1(x)
    # exactly, so the bias is position-independent.
    s1, t1 = _bn_fold(params["bn1_gamma"], params["bn1_beta"],
                      params["bn1_mean"], params["bn1_var"], eps)
    w1 = jnp.transpose(params["conv1_w"], (2, 3, 1, 0))            # OIHW -> HWIO
    w1s = (w1 * s1[None, None, :, None]).astype(cdt)
    b1 = jnp.einsum("hwio,i->o", w1, t1)                           # (depth,) f32
    p1 = -t1 / s1
    xp1 = (jnp.pad(x - p1, ((0, 0), (1, 1), (1, 1), (0, 0))) + p1).astype(cdt)

    h1_flat = _conv3x3_prelu(xp1, w1s, b1, params["prelu_alpha"],
                             row_block=row_block)
    h1 = h1_flat.reshape(n, h, w, depth)

    # ---- shortcut operand (consumed inside the second conv kernel) ----------
    ho = (h - 1) // stride + 1
    wo = (w - 1) // stride + 1
    x_sub = x[:, ::stride, ::stride, :][:, :ho, :wo, :]
    if cin == depth:
        sc_flat = x_sub.reshape(n, ho * wo, cin).astype(cdt)
        sc_w = sc_s = sc_t = None
    else:
        sc_s, sc_t = _bn_fold(params["bnsc_gamma"], params["bnsc_beta"],
                              params["bnsc_mean"], params["bnsc_var"], eps)
        sc_w = params["convsc_w"].reshape(depth, cin).T.astype(cdt)  # (Cin, depth)
        sc_flat = x_sub.reshape(n, ho * wo, cin).astype(cdt)

    # ---- conv2(stride) + BN2 + shortcut add, one fused kernel ---------------
    s2, t2 = _bn_fold(params["bn2_gamma"], params["bn2_beta"],
                      params["bn2_mean"], params["bn2_var"], eps)
    w2 = jnp.transpose(params["conv2_w"], (2, 3, 1, 0)).astype(cdt)
    out_flat = _conv3x3_bn_add(h1, sc_flat, w2, s2, t2, stride=stride,
                               sc_w=sc_w, sc_s=sc_s, sc_t=sc_t,
                               row_block=row_block)
    out = out_flat.reshape(n, ho, wo, depth)
    return jnp.transpose(out, (0, 3, 1, 2)).astype(x_nchw.dtype)   # NHWC -> NCHW


# ----------------------------------------------------------------------------
# Pure-JAX reference (mirrors the PyTorch module in eval mode)
# ----------------------------------------------------------------------------

def _reference_forward(x, params, *, stride, eps=1e-5):
    prec = lax.Precision.HIGHEST

    def bn(z, g, b, m, v):
        s = g / jnp.sqrt(v + eps)
        return z * s[None, :, None, None] + (b - m * s)[None, :, None, None]

    def conv(z, wgt, s, pad):
        return lax.conv_general_dilated(
            z, wgt, window_strides=(s, s), padding=((pad, pad), (pad, pad)),
            dimension_numbers=("NCHW", "OIHW", "NCHW"), precision=prec)

    cin = x.shape[1]
    depth = params["conv1_w"].shape[0]

    r = bn(x, params["bn1_gamma"], params["bn1_beta"],
           params["bn1_mean"], params["bn1_var"])
    r = conv(r, params["conv1_w"], 1, 1)
    a = params["prelu_alpha"][None, :, None, None]
    r = jnp.where(r > 0, r, a * r)
    r = conv(r, params["conv2_w"], stride, 1)
    r = bn(r, params["bn2_gamma"], params["bn2_beta"],
           params["bn2_mean"], params["bn2_var"])

    if cin == depth:
        sc = x[:, :, ::stride, ::stride]
    else:
        sc = conv(x, params["convsc_w"], stride, 0)
        sc = bn(sc, params["bnsc_gamma"], params["bnsc_beta"],
                params["bnsc_mean"], params["bnsc_var"])
    return r + sc


# ----------------------------------------------------------------------------
# Demo
# ----------------------------------------------------------------------------

def _make_params(key, cin, depth):
    ks = jax.random.split(key, 16)

    def unif(k, shape, lo, hi):
        return jax.random.uniform(k, shape, jnp.float32, lo, hi)

    return dict(
        bn1_gamma=unif(ks[0], (cin,), 0.5, 1.5),
        bn1_beta=0.1 * jax.random.normal(ks[1], (cin,), jnp.float32),
        bn1_mean=0.1 * jax.random.normal(ks[2], (cin,), jnp.float32),
        bn1_var=unif(ks[3], (cin,), 0.5, 1.5),
        conv1_w=jax.random.normal(ks[4], (depth, cin, 3, 3), jnp.float32)
        / math.sqrt(9 * cin),
        prelu_alpha=0.25 + 0.05 * jax.random.normal(ks[5], (depth,), jnp.float32),
        conv2_w=jax.random.normal(ks[6], (depth, depth, 3, 3), jnp.float32)
        / math.sqrt(9 * depth),
        bn2_gamma=unif(ks[7], (depth,), 0.5, 1.5),
        bn2_beta=0.1 * jax.random.normal(ks[8], (depth,), jnp.float32),
        bn2_mean=0.1 * jax.random.normal(ks[9], (depth,), jnp.float32),
        bn2_var=unif(ks[10], (depth,), 0.5, 1.5),
        convsc_w=jax.random.normal(ks[11], (depth, cin, 1, 1), jnp.float32)
        / math.sqrt(cin),
        bnsc_gamma=unif(ks[12], (depth,), 0.5, 1.5),
        bnsc_beta=0.1 * jax.random.normal(ks[13], (depth,), jnp.float32),
        bnsc_mean=0.1 * jax.random.normal(ks[14], (depth,), jnp.float32),
        bnsc_var=unif(ks[15], (depth,), 0.5, 1.5),
    )


if __name__ == "__main__":
    key = jax.random.PRNGKey(0)
    k_a, k_b, kx_a, kx_b = jax.random.split(key, 4)

    # --- Config A: projection shortcut (Cin != depth), stride 2 --------------
    # row_block=4 forces multiple row tiles at demo scale; production leaves it
    # at None (auto -> ~512-row MXU M per tap matmul).
    N, Cin, H, W, depth, stride = 2, 8, 16, 16, 16, 2
    params_a = _make_params(k_a, Cin, depth)
    x_a = jax.random.normal(kx_a, (N, Cin, H, W), jnp.float32)

    out_a = jax.block_until_ready(
        bottleneck_ir_forward(x_a, params_a, stride=stride, row_block=4))
    ref_a = _reference_forward(x_a, params_a, stride=stride)
    Ho, Wo = (H - 1) // stride + 1, (W - 1) // stride + 1
    assert out_a.shape == (N, depth, Ho, Wo)
    err_a = float(jnp.max(jnp.abs(out_a - ref_a)))
    assert jnp.allclose(out_a, ref_a, atol=3e-2, rtol=3e-2), (
        "config A (f32) mismatch, max abs err = %f" % err_a)

    # Same block with bf16 activations/weights (f32 accumulation/epilogue).
    out_a16 = jax.block_until_ready(
        bottleneck_ir_forward(x_a, params_a, stride=stride, row_block=4,
                              compute_dtype=jnp.bfloat16)).astype(jnp.float32)
    err_a16 = float(jnp.max(jnp.abs(out_a16 - ref_a)))
    assert jnp.allclose(out_a16, ref_a, atol=1.5e-1, rtol=1.5e-1), (
        "config A (bf16) mismatch, max abs err = %f" % err_a16)

    # --- Config B: identity shortcut (Cin == depth), stride 1 ----------------
    N2, C2, H2, W2 = 2, 16, 16, 16
    params_b = _make_params(k_b, C2, C2)
    x_b = jax.random.normal(kx_b, (N2, C2, H2, W2), jnp.float32)

    out_b = jax.block_until_ready(
        bottleneck_ir_forward(x_b, params_b, stride=1, row_block=4))
    ref_b = _reference_forward(x_b, params_b, stride=1)
    assert out_b.shape == (N2, C2, H2, W2)
    err_b = float(jnp.max(jnp.abs(out_b - ref_b)))
    assert jnp.allclose(out_b, ref_b, atol=3e-2, rtol=3e-2), (
        "config B (f32) mismatch, max abs err = %f" % err_b)

    print("KERNEL_OK")
</pallas_src>

<mosaic_0001>
module attributes {stable_mosaic.version = 11 : i64} {
  func.func @_conv3x3_s1_prelu_kernel(%arg0: i32, %arg1: i32, %arg2: memref<1x18x18x8xf32, #tpu.memory_space<vmem>>, %arg3: memref<3x3x8x16xf32, #tpu.memory_space<vmem>>, %arg4: memref<1x16xf32, #tpu.memory_space<vmem>>, %arg5: memref<1x16xf32, #tpu.memory_space<vmem>>, %arg6: memref<1x64x16xf32, #tpu.memory_space<vmem>>) attributes {dimension_semantics = [#tpu.dimension_semantics<parallel>, #tpu.dimension_semantics<parallel>], iteration_bounds = array<i64: 2, 4>, scalar_prefetch = 0 : i64, scratch_operands = 0 : i64, tpu.core_type = #tpu.core_type<tc>, window_params = [{transform_indices = @transform_0, window_bounds = array<i64: 1, 18, 18, 8>}, {pipeline_mode = #tpu.pipeline_mode<synchronous>, transform_indices = @transform_1, window_bounds = array<i64: 3, 3, 8, 16>}, {pipeline_mode = #tpu.pipeline_mode<synchronous>, transform_indices = @transform_2, window_bounds = array<i64: 1, 16>}, {pipeline_mode = #tpu.pipeline_mode<synchronous>, transform_indices = @transform_3, window_bounds = array<i64: 1, 16>}, {transform_indices = @transform_4, window_bounds = array<i64: 1, 64, 16>}]} {
    %c4_i32 = arith.constant 4 : i32
    %0 = arith.muli %arg1, %c4_i32 : i32
    %c0_i32 = arith.constant 0 : i32
    %1 = arith.addi %0, %c0_i32 : i32
    %c0 = arith.constant 0 : index
    %2 = arith.index_cast %1 : i32 to index
    %c0_0 = arith.constant 0 : index
    %c0_1 = arith.constant 0 : index
    %3 = vector.load %arg2[%c0, %2, %c0_0, %c0_1] : memref<1x18x18x8xf32, #tpu.memory_space<vmem>>, vector<1x4x18x8xf32>
    %4 = vector.shape_cast %3 : vector<1x4x18x8xf32> to vector<4x18x8xf32>
    %5 = vector.extract_strided_slice %4 {offsets = [0, 0, 0], sizes = [4, 16, 8], strides = [1, 1, 1]} : vector<4x18x8xf32> to vector<4x16x8xf32>
    %6 = vector.shape_cast %5 : vector<4x16x8xf32> to vector<64x8xf32>
    %c0_2 = arith.constant 0 : index
    %c0_3 = arith.constant 0 : index
    %c0_4 = arith.constant 0 : index
    %c0_5 = arith.constant 0 : index
    %7 = vector.load %arg3[%c0_2, %c0_3, %c0_4, %c0_5] : memref<3x3x8x16xf32, #tpu.memory_space<vmem>>, vector<1x1x8x16xf32>
    %8 = vector.shape_cast %7 : vector<1x1x8x16xf32> to vector<8x16xf32>
    %cst = arith.constant dense<0.000000e+00> : vector<64x16xf32>
    %9 = tpu.matmul %6, %8, %cst {dimension_numbers = #tpu.dot_dimension_numbers<[1], [0], [0], [1], [0, 0, 1, 1], [], []>} : vector<64x8xf32>, vector<8x16xf32>, vector<64x16xf32> -> vector<64x16xf32>
    %10 = vector.extract_strided_slice %4 {offsets = [0, 1, 0], sizes = [4, 16, 8], strides = [1, 1, 1]} : vector<4x18x8xf32> to vector<4x16x8xf32>
    %11 = vector.shape_cast %10 : vector<4x16x8xf32> to vector<64x8xf32>
    %c0_6 = arith.constant 0 : index
    %c1 = arith.constant 1 : index
    %c0_7 = arith.constant 0 : index
    %c0_8 = arith.constant 0 : index
    %12 = vector.load %arg3[%c0_6, %c1, %c0_7, %c0_8] : memref<3x3x8x16xf32, #tpu.memory_space<vmem>>, vector<1x1x8x16xf32>
    %13 = vector.shape_cast %12 : vector<1x1x8x16xf32> to vector<8x16xf32>
    %cst_9 = arith.constant dense<0.000000e+00> : vector<64x16xf32>
    %14 = tpu.matmul %11, %13, %cst_9 {dimension_numbers = #tpu.dot_dimension_numbers<[1], [0], [0], [1], [0, 0, 1, 1], [], []>} : vector<64x8xf32>, vector<8x16xf32>, vector<64x16xf32> -> vector<64x16xf32>
    %15 = arith.addf %9, %14 : vector<64x16xf32>
    %16 = vector.extract_strided_slice %4 {offsets = [0, 2, 0], sizes = [4, 16, 8], strides = [1, 1, 1]} : vector<4x18x8xf32> to vector<4x16x8xf32>
    %17 = vector.shape_cast %16 : vector<4x16x8xf32> to vector<64x8xf32>
    %c0_10 = arith.constant 0 : index
    %c2 = arith.constant 2 : index
    %c0_11 = arith.constant 0 : index
    %c0_12 = arith.constant 0 : index
    %18 = vector.load %arg3[%c0_10, %c2, %c0_11, %c0_12] : memref<3x3x8x16xf32, #tpu.memory_space<vmem>>, vector<1x1x8x16xf32>
    %19 = vector.shape_cast %18 : vector<1x1x8x16xf32> to vector<8x16xf32>
    %cst_13 = arith.constant dense<0.000000e+00> : vector<64x16xf32>
    %20 = tpu.matmul %17, %19, %cst_13 {dimension_numbers = #tpu.dot_dimension_numbers<[1], [0], [0], [1], [0, 0, 1, 1], [], []>} : vector<64x8xf32>, vector<8x16xf32>, vector<64x16xf32> -> vector<64x16xf32>
    %21 = arith.addf %15, %20 : vector<64x16xf32>
    %c1_i32 = arith.constant 1 : i32
    %22 = arith.addi %0, %c1_i32 : i32
    %c0_14 = arith.constant 0 : index
    %23 = arith.index_cast %22 : i32 to index
    %c0_15 = arith.constant 0 : index
    %c0_16 = arith.constant 0 : index
    %24 = vector.load %arg2[%c0_14, %23, %c0_15, %c0_16] : memref<1x18x18x8xf32, #tpu.memory_space<vmem>>, vector<1x4x18x8xf32>
    %25 = vector.shape_cast %24 : vector<1x4x18x8xf32> to vector<4x18x8xf32>
    %26 = vector.extract_strided_slice %25 {offsets = [0, 0, 0], sizes = [4, 16, 8], strides = [1, 1, 1]} : vector<4x18x8xf32> to vector<4x16x8xf32>
    %27 = vector.shape_cast %26 : vector<4x16x8xf32> to vector<64x8xf32>
    %c1_17 = arith.constant 1 : index
    %c0_18 = arith.constant 0 : index
    %c0_19 = arith.constant 0 : index
    %c0_20 = arith.constant 0 : index
    %28 = vector.load %arg3[%c1_17, %c0_18, %c0_19, %c0_20] : memref<3x3x8x16xf32, #tpu.memory_space<vmem>>, vector<1x1x8x16xf32>
    %29 = vector.shape_cast %28 : vector<1x1x8x16xf32> to vector<8x16xf32>
    %cst_21 = arith.constant dense<0.000000e+00> : vector<64x16xf32>
    %30 = tpu.matmul %27, %29, %cst_21 {dimension_numbers = #tpu.dot_dimension_numbers<[1], [0], [0], [1], [0, 0, 1, 1], [], []>} : vector<64x8xf32>, vector<8x16xf32>, vector<64x16xf32> -> vector<64x16xf32>
    %31 = arith.addf %21, %30 : vector<64x16xf32>
    %32 = vector.extract_strided_slice %25 {offsets = [0, 1, 0], sizes = [4, 16, 8], strides = [1, 1, 1]} : vector<4x18x8xf32> to vector<4x16x8xf32>
    %33 = vector.shape_cast %32 : vector<4x16x8xf32> to vector<64x8xf32>
    %c1_22 = arith.constant 1 : index
    %c1_23 = arith.constant 1 : index
    %c0_24 = arith.constant 0 : index
    %c0_25 = arith.constant 0 : index
    %34 = vector.load %arg3[%c1_22, %c1_23, %c0_24, %c0_25] : memref<3x3x8x16xf32, #tpu.memory_space<vmem>>, vector<1x1x8x16xf32>
    %35 = vector.shape_cast %34 : vector<1x1x8x16xf32> to vector<8x16xf32>
    %cst_26 = arith.constant dense<0.000000e+00> : vector<64x16xf32>
    %36 = tpu.matmul %33, %35, %cst_26 {dimension_numbers = #tpu.dot_dimension_numbers<[1], [0], [0], [1], [0, 0, 1, 1], [], []>} : vector<64x8xf32>, vector<8x16xf32>, vector<64x16xf32> -> vector<64x16xf32>
    %37 = arith.addf %31, %36 : vector<64x16xf32>
    %38 = vector.extract_strided_slice %25 {offsets = [0, 2, 0], sizes = [4, 16, 8], strides = [1, 1, 1]} : vector<4x18x8xf32> to vector<4x16x8xf32>
    %39 = vector.shape_cast %38 : vector<4x16x8xf32> to vector<64x8xf32>
    %c1_27 = arith.constant 1 : index
    %c2_28 = arith.constant 2 : index
    %c0_29 = arith.constant 0 : index
    %c0_30 = arith.constant 0 : index
    %40 = vector.load %arg3[%c1_27, %c2_28, %c0_29, %c0_30] : memref<3x3x8x16xf32, #tpu.memory_space<vmem>>, vector<1x1x8x16xf32>
    %41 = vector.shape_cast %40 : vector<1x1x8x16xf32> to vector<8x16xf32>
    %cst_31 = arith.constant dense<0.000000e+00> : vector<64x16xf32>
    %42 = tpu.matmul %39, %41, %cst_31 {dimension_numbers = #tpu.dot_dimension_numbers<[1], [0], [0], [1], [0, 0, 1, 1], [], []>} : vector<64x8xf32>, vector<8x16xf32>, vector<64x16xf32> -> vector<64x16xf32>
    %43 = arith.addf %37, %42 : vector<64x16xf32>
    %c2_i32 = arith.constant 2 : i32
    %44 = arith.addi %0, %c2_i32 : i32
    %c0_32 = arith.constant 0 : index
    %45 = arith.index_cast %44 : i32 to index
    %c0_33 = arith.constant 0 : index
    %c0_34 = arith.constant 0 : index
    %46 = vector.load %arg2[%c0_32, %45, %c0_33, %c0_34] : memref<1x18x18x8xf32, #tpu.memory_space<vmem>>, vector<1x4x18x8xf32>
    %47 = vector.shape_cast %46 : vector<1x4x18x8xf32> to vector<4x18x8xf32>
    %48 = vector.extract_strided_slice %47 {offsets = [0, 0, 0], sizes = [4, 16, 8], strides = [1, 1, 1]} : vector<4x18x8xf32> to vector<4x16x8xf32>
    %49 = vector.shape_cast %48 : vector<4x16x8xf32> to vector<64x8xf32>
    %c2_35 = arith.constant 2 : index
    %c0_36 = arith.constant 0 : index
    %c0_37 = arith.constant 0 : index
    %c0_38 = arith.constant 0 : index
    %50 = vector.load %arg3[%c2_35, %c0_36, %c0_37, %c0_38] : memref<3x3x8x16xf32, #tpu.memory_space<vmem>>, vector<1x1x8x16xf32>
    %51 = vector.shape_cast %50 : vector<1x1x8x16xf32> to vector<8x16xf32>
    %cst_39 = arith.constant dense<0.000000e+00> : vector<64x16xf32>
    %52 = tpu.matmul %49, %51, %cst_39 {dimension_numbers = #tpu.dot_dimension_numbers<[1], [0], [0], [1], [0, 0, 1, 1], [], []>} : vector<64x8xf32>, vector<8x16xf32>, vector<64x16xf32> -> vector<64x16xf32>
    %53 = arith.addf %43, %52 : vector<64x16xf32>
    %54 = vector.extract_strided_slice %47 {offsets = [0, 1, 0], sizes = [4, 16, 8], strides = [1, 1, 1]} : vector<4x18x8xf32> to vector<4x16x8xf32>
    %55 = vector.shape_cast %54 : vector<4x16x8xf32> to vector<64x8xf32>
    %c2_40 = arith.constant 2 : index
    %c1_41 = arith.constant 1 : index
    %c0_42 = arith.constant 0 : index
    %c0_43 = arith.constant 0 : index
    %56 = vector.load %arg3[%c2_40, %c1_41, %c0_42, %c0_43] : memref<3x3x8x16xf32, #tpu.memory_space<vmem>>, vector<1x1x8x16xf32>
    %57 = vector.shape_cast %56 : vector<1x1x8x16xf32> to vector<8x16xf32>
    %cst_44 = arith.constant dense<0.000000e+00> : vector<64x16xf32>
    %58 = tpu.matmul %55, %57, %cst_44 {dimension_numbers = #tpu.dot_dimension_numbers<[1], [0], [0], [1], [0, 0, 1, 1], [], []>} : vector<64x8xf32>, vector<8x16xf32>, vector<64x16xf32> -> vector<64x16xf32>
    %59 = arith.addf %53, %58 : vector<64x16xf32>
    %60 = vector.extract_strided_slice %47 {offsets = [0, 2, 0], sizes = [4, 16, 8], strides = [1, 1, 1]} : vector<4x18x8xf32> to vector<4x16x8xf32>
    %61 = vector.shape_cast %60 : vector<4x16x8xf32> to vector<64x8xf32>
    %c2_45 = arith.constant 2 : index
    %c2_46 = arith.constant 2 : index
    %c0_47 = arith.constant 0 : index
    %c0_48 = arith.constant 0 : index
    %62 = vector.load %arg3[%c2_45, %c2_46, %c0_47, %c0_48] : memref<3x3x8x16xf32, #tpu.memory_space<vmem>>, vector<1x1x8x16xf32>
    %63 = vector.shape_cast %62 : vector<1x1x8x16xf32> to vector<8x16xf32>
    %cst_49 = arith.constant dense<0.000000e+00> : vector<64x16xf32>
    %64 = tpu.matmul %61, %63, %cst_49 {dimension_numbers = #tpu.dot_dimension_numbers<[1], [0], [0], [1], [0, 0, 1, 1], [], []>} : vector<64x8xf32>, vector<8x16xf32>, vector<64x16xf32> -> vector<64x16xf32>
    %65 = arith.addf %59, %64 : vector<64x16xf32>
    %c0_50 = arith.constant 0 : index
    %c0_51 = arith.constant 0 : index
    %66 = vector.load %arg4[%c0_50, %c0_51] : memref<1x16xf32, #tpu.memory_space<vmem>>, vector<1x16xf32>
    %67 = vector.broadcast %66 : vector<1x16xf32> to vector<64x16xf32>
    %68 = arith.addf %65, %67 : vector<64x16xf32>
    %cst_52 = arith.constant 0.000000e+00 : f32
    %69 = vector.broadcast %cst_52 : f32 to vector<64x16xf32>
    %70 = arith.cmpf ogt, %68, %69 : vector<64x16xf32>
    %c0_53 = arith.constant 0 : index
    %c0_54 = arith.constant 0 : index
    %71 = vector.load %arg5[%c0_53, %c0_54] : memref<1x16xf32, #tpu.memory_space<vmem>>, vector<1x16xf32>
    %72 = vector.broadcast %71 : vector<1x16xf32> to vector<64x16xf32>
    %73 = arith.mulf %68, %72 : vector<64x16xf32>
    %74 = arith.select %70, %68, %73 : vector<64x16xi1>, vector<64x16xf32>
    %c0_55 = arith.constant 0 : index
    %c0_56 = arith.constant 0 : index
    %c0_57 = arith.constant 0 : index
    %75 = vector.load %arg6[%c0_55, %c0_56, %c0_57] : memref<1x64x16xf32, #tpu.memory_space<vmem>>, vector<1x64x16xf32>
    %76 = vector.shape_cast %75 : vector<1x64x16xf32> to vector<64x16xf32>
    %77 = vector.shape_cast %74 : vector<64x16xf32> to vector<1x64x16xf32>
    tpu.vector_store %arg6[%c0_55, %c0_56, %c0_57], %77 {strides = array<i32>} : memref<1x64x16xf32, #tpu.memory_space<vmem>>, vector<1x64x16xf32>,
    return
  }
  func.func @transform_0(%arg0: i32, %arg1: i32) -> (i32, i32, i32, i32) {
    %c0_i32 = arith.constant 0 : i32
    %c0_i32_0 = arith.constant 0 : i32
    %c0_i32_1 = arith.constant 0 : i32
    %c0_i32_2 = arith.constant 0 : i32
    return %arg0, %c0_i32, %c0_i32_0, %c0_i32_1 : i32, i32, i32, i32
  }
  func.func @transform_1(%arg0: i32, %arg1: i32) -> (i32, i32, i32, i32) {
    %c0_i32 = arith.constant 0 : i32
    %c0_i32_0 = arith.constant 0 : i32
    %c0_i32_1 = arith.constant 0 : i32
    %c0_i32_2 = arith.constant 0 : i32
    %c0_i32_3 = arith.constant 0 : i32
    return %c0_i32, %c0_i32_0, %c0_i32_1, %c0_i32_2 : i32, i32, i32, i32
  }
  func.func @transform_2(%arg0: i32, %arg1: i32) -> (i32, i32) {
    %c0_i32 = arith.constant 0 : i32
    %c0_i32_0 = arith.constant 0 : i32
    %c0_i32_1 = arith.constant 0 : i32
    return %c0_i32, %c0_i32_0 : i32, i32
  }
  func.func @transform_3(%arg0: i32, %arg1: i32) -> (i32, i32) {
    %c0_i32 = arith.constant 0 : i32
    %c0_i32_0 = arith.constant 0 : i32
    %c0_i32_1 = arith.constant 0 : i32
    return %c0_i32, %c0_i32_0 : i32, i32
  }
  func.func @transform_4(%arg0: i32, %arg1: i32) -> (i32, i32, i32) {
    %c0_i32 = arith.constant 0 : i32
    %c0_i32_0 = arith.constant 0 : i32
    return %arg0, %arg1, %c0_i32 : i32, i32, i32
  }
}

</mosaic_0001>

<llo_original>
// kernel: tpu_custom_call.1
$region0: #{tpu_custom_call.1}
  #allocation0 [shape = 'u32[]', space=smem, size = 0x4, offset = 0x4, fixed_abs, tag = 'smem constant byte address 0x4 - core index']
  #allocation1 [shape = 'u32[144,128]{1,0:T(1,128)}', space=vmem, size = 0x12000, scoped, tag = 'internal scratch']
  %s0 = inlined_call_operand.vmem [shape: f32[2,18,18,8], index: 0, kind: input, shape index: {}]
  %s1 = inlined_call_operand.vmem [shape: f32[3,3,8,16], index: 1, kind: input, shape index: {}]
  %s2 = inlined_call_operand.vmem [shape: f32[1,16], index: 2, kind: input, shape index: {}]
  %s3 = inlined_call_operand.vmem [shape: f32[1,16], index: 3, kind: input, shape index: {}]
  %s4 = inlined_call_operand.vmem [shape: f32[2,256,16], index: 4, kind: output, shape index: {}]
  %s5 = sld [smem:[#allocation0]]
  $region49: #{tpu_custom_call.1} parent=0
    _
  %s7 = ssub.s32 1, %s5
  %s8 = scalar_select 0, %s7, %s5
  loop: start=0, step=1, limit=10
  $region2: #{tpu_custom_call.1} parent=0 // loop_pre_header
    _
  $region3: #{tpu_custom_call.1} parent=0 // loop_header
    %s10 = sphi 0, %s14
    %p11 = scmp.ge.s32.totalorder %s10, 10
    %s17 = sphi 0, %s29
    %s18 = sphi 0, %s25
    %s19 = sphi 0, %s17
    %s20 = sphi 0, %s18
    %s21 = sphi 0, %s19
    %s22 = sphi 0, %s20
    %s32 = sphi 0, %s34
    %s35 = sphi 0, %s32
    %s36 = sphi 0, %s35
    %s52 = sphi 0, %s36
    %s56 = sphi 0, %s56
    %s58 = sphi 0, %s56
    %s59 = sphi 0, %s58
    %s73 = sphi 0, %s59
    %s77 = sphi 0, %s77
    %s79 = sphi 0, %s77
    %s80 = sphi 0, %s79
    %s94 = sphi 0, %s80
    %s98 = sphi 0, %s98
    %s100 = sphi 0, %s98
    %s101 = sphi 0, %s100
    %s115 = sphi 0, %s101
    %s123 = sphi 0, %s125
    %s126 = sphi 0, %s123
    %s127 = sphi 0, %s126
    %s143 = sphi 0, %s127
  $region4: #{tpu_custom_call.1} parent=0 // loop_header_branch
    %13 = sbr.rel (%p11) target = $region8
  $region5: #{tpu_custom_call.1} parent=0 // loop_body
    %s15 = ssub.s32 %s10, 1
    %s16 = ssub.s32 %s10, 2
    %s23 = sadd.s32 1, %s18
    %p24 = scmp.ge.s32.totalorder %s23, 4
    %s25 = scalar_select %p24, 0, %s23
    %s26 = sadd.s32 1, %s17
    %s27 = scalar_select %p24, %s26, %s17
    %p28 = scmp.ge.s32.totalorder %s27, 2
    %s29 = scalar_select %p28, 0, %s27
    %s30 = ssub.s32 %s17, %s29
    %p31 = scmp.eq.s32.totalorder %s30, 0
    %s33 = sadd.s32 %s32, 1
    %s34 = scalar_select %p31, %s32, %s33
    %p37 = pneg %p31
    %p38 = scmp.eq.s32.totalorder %s10, 7
    %p39 = por %p37, %p38
    %p40 = scmp.ne.s32.totalorder %s32, %s35
    %p41 = scmp.eq.s32.totalorder %s10, 0
    %p42 = por %p40, %p41
    %p43 = scmp.ne.s32.totalorder %s32, %s35
    %p44 = scmp.eq.s32.totalorder %s15, 7
    %p45 = por %p43, %p44
    %p46 = scmp.ne.s32.totalorder %s35, %s36
    %p47 = scmp.eq.s32.totalorder %s15, 0
    %p48 = por %p46, %p47
    %p49 = scmp.ne.s32.totalorder %s35, %s36
    %p50 = scmp.eq.s32.totalorder %s16, 7
    %p51 = por %p49, %p50
    %p53 = scmp.ne.s32.totalorder %s36, %s52
    %p54 = scmp.eq.s32.totalorder %s16, 0
    %p55 = por %p53, %p54
    %s57 = sadd.s32 %s56, 1
    %p60 = scmp.eq.s32.totalorder %s10, 7
    %p61 = scmp.ne.s32.totalorder %s56, %s58
    %p62 = scmp.eq.s32.totalorder %s10, 0
    %p63 = por %p61, %p62
    %p64 = scmp.ne.s32.totalorder %s56, %s58
    %p65 = scmp.eq.s32.totalorder %s15, 7
    %p66 = por %p64, %p65
    %p67 = scmp.ne.s32.totalorder %s58, %s59
    %p68 = scmp.eq.s32.totalorder %s15, 0
    %p69 = por %p67, %p68
    %p70 = scmp.ne.s32.totalorder %s58, %s59
    %p71 = scmp.eq.s32.totalorder %s16, 7
    %p72 = por %p70, %p71
    %p74 = scmp.ne.s32.totalorder %s59, %s73
    %p75 = scmp.eq.s32.totalorder %s16, 0
    %p76 = por %p74, %p75
    %s78 = sadd.s32 %s77, 1
    %p81 = scmp.eq.s32.totalorder %s10, 7
    %p82 = scmp.ne.s32.totalorder %s77, %s79
    %p83 = scmp.eq.s32.totalorder %s10, 0
    %p84 = por %p82, %p83
    %p85 = scmp.ne.s32.totalorder %s77, %s79
    %p86 = scmp.eq.s32.totalorder %s15, 7
    %p87 = por %p85, %p86
    %p88 = scmp.ne.s32.totalorder %s79, %s80
    %p89 = scmp.eq.s32.totalorder %s15, 0
    %p90 = por %p88, %p89
    %p91 = scmp.ne.s32.totalorder %s79, %s80
    %p92 = scmp.eq.s32.totalorder %s16, 7
    %p93 = por %p91, %p92
    %p95 = scmp.ne.s32.totalorder %s80, %s94
    %p96 = scmp.eq.s32.totalorder %s16, 0
    %p97 = por %p95, %p96
    %s99 = sadd.s32 %s98, 1
    %p102 = scmp.eq.s32.totalorder %s10, 7
    %p103 = scmp.ne.s32.totalorder %s98, %s100
    %p104 = scmp.eq.s32.totalorder %s10, 0
    %p105 = por %p103, %p104
    %p106 = scmp.ne.s32.totalorder %s98, %s100
    %p107 = scmp.eq.s32.totalorder %s15, 7
    %p108 = por %p106, %p107
    %p109 = scmp.ne.s32.totalorder %s100, %s101
    %p110 = scmp.eq.s32.totalorder %s15, 0
    %p111 = por %p109, %p110
    %p112 = scmp.ne.s32.totalorder %s100, %s101
    %p113 = scmp.eq.s32.totalorder %s16, 7
    %p114 = por %p112, %p113
    %p116 = scmp.ne.s32.totalorder %s101, %s115
    %p117 = scmp.eq.s32.totalorder %s16, 0
    %p118 = por %p116, %p117
    %s119 = ssub.s32 %s17, %s29
    %s120 = ssub.s32 %s18, %s25
    %s121 = sor.u32 %s119, %s120
    %p122 = scmp.eq.s32.totalorder %s121, 0
    %s124 = sadd.s32 %s123, 1
    %s125 = scalar_select %p122, %s123, %s124
    %p128 = pneg %p122
    %p129 = scmp.eq.s32.totalorder %s10, 7
    %p130 = por %p128, %p129
    %p131 = scmp.ne.s32.totalorder %s123, %s126
    %p132 = scmp.eq.s32.totalorder %s10, 0
    %p133 = por %p131, %p132
    %p134 = scmp.ne.s32.totalorder %s123, %s126
    %p135 = scmp.eq.s32.totalorder %s15, 7
    %p136 = por %p134, %p135
    %p137 = scmp.ne.s32.totalorder %s126, %s127
    %p138 = scmp.eq.s32.totalorder %s15, 0
    %p139 = por %p137, %p138
    %p140 = scmp.ne.s32.totalorder %s126, %s127
    %p141 = scmp.eq.s32.totalorder %s16, 7
    %p142 = por %p140, %p141
    %p144 = scmp.ne.s32.totalorder %s127, %s143
    %p145 = scmp.eq.s32.totalorder %s16, 0
    %p146 = por %p144, %p145
    %p147 = scmp.le.s32.totalorder 1, %s10
    %p148 = scmp.lt.s32.totalorder %s10, 9
    %p149 = pnand %p147, %p148
    %p150 = pneg %p149
    // Predicated region
    $region9: #{tpu_custom_call.1} parent=5 // pred_check
      _
    $region10: #{tpu_custom_call.1} parent=5 // pred_check_branch
      %152 = sbr.rel (%p149) target = $region12
    $region11: #{tpu_custom_call.1} parent=5 // pred_region
      %s153 = ssub.s32 %s10, 1
      // Predicated region
      $region13: #{tpu_custom_call.1} parent=11 // pred_check
        %p154 = pneg %p69
      $region14: #{tpu_custom_call.1} parent=11 // pred_check_branch
        %156 = sbr.rel (%p154) target = $region16
      $region15: #{tpu_custom_call.1} parent=11 // pred_region
        _
      $region16: #{tpu_custom_call.1} parent=11 // pred_fallthru
        _
      // Predicated region
      $region17: #{tpu_custom_call.1} parent=11 // pred_check
        %p157 = pneg %p90
      $region18: #{tpu_custom_call.1} parent=11 // pred_check_branch
        %159 = sbr.rel (%p157) target = $region20
      $region19: #{tpu_custom_call.1} parent=11 // pred_region
        _
      $region20: #{tpu_custom_call.1} parent=11 // pred_fallthru
        _
      // Predicated region
      $region21: #{tpu_custom_call.1} parent=11 // pred_check
        %p160 = pneg %p111
      $region22: #{tpu_custom_call.1} parent=11 // pred_check_branch
        %162 = sbr.rel (%p160) target = $region24
      $region23: #{tpu_custom_call.1} parent=11 // pred_region
        _
      $region24: #{tpu_custom_call.1} parent=11 // pred_fallthru
        _
    $region12: #{tpu_custom_call.1} parent=5 // pred_fallthru
      _
    %p163 = scmp.lt.s32.totalorder %s10, 8
    // Predicated region
    $region25: #{tpu_custom_call.1} parent=5 // pred_check
      %p164 = pneg %p163
    $region26: #{tpu_custom_call.1} parent=5 // pred_check_branch
      %166 = sbr.rel (%p164) target = $region28
    $region27: #{tpu_custom_call.1} parent=5 // pred_region
      // Predicated region
      $region29: #{tpu_custom_call.1} parent=27 // pred_check
        %p167 = pneg %p42
      $region30: #{tpu_custom_call.1} parent=27 // pred_check_branch
        %169 = sbr.rel (%p167) target = $region32
      $region31: #{tpu_custom_call.1} parent=27 // pred_region
        %p170 = scmp.lt.s32.totalorder %s17, 1
        %s171 = scalar_select %p170, %s17, 1
        %s172 = smul.addr %s171, 54
        %s173 = smul.addr %s172, 8
        %s174 = scalar_lea.vmem %s0, %s173
      $region32: #{tpu_custom_call.1} parent=27 // pred_fallthru
        _
    $region28: #{tpu_custom_call.1} parent=5 // pred_fallthru
      _
    %p175 = scmp.le.s32.totalorder 1, %s10
    %p176 = scmp.lt.s32.totalorder %s10, 9
    %p177 = pnand %p175, %p176
    %p178 = pneg %p177
    // Predicated region
    $region33: #{tpu_custom_call.1} parent=5 // pred_check
      _
    $region34: #{tpu_custom_call.1} parent=5 // pred_check_branch
      %180 = sbr.rel (%p177) target = $region36
    $region35: #{tpu_custom_call.1} parent=5 // pred_region
      %s181 = ssub.s32 %s10, 1
      %p182 = scmp.lt.s32.totalorder %s19, 1
      %s183 = scalar_select %p182, %s19, 1
      %s184 = smul.addr %s183, 54
      %s185 = smul.addr %s184, 8
      %s186 = scalar_lea.vmem %s0, %s185
      %p187 = pneg %p48
      %p188 = pneg %p45
      %p189 = pneg %p69
      %p190 = pneg %p66
      %p191 = pneg %p90
      %p192 = pneg %p87
      %p193 = pneg %p111
      %p194 = pneg %p108
      %p195 = pneg %p139
      %p196 = pneg %p136
      %s197 = smul.u32 8, %s20
      %p198 = scmp.lt.s32.totalorder %s19, 1
      %s199 = scalar_select %p198, %s19, 1
      %p200 = scmp.lt.s32.totalorder %s197, 31
      %s201 = scalar_select %p200, %s197, 31
      %s202 = smul.addr %s199, 32
      %s203 = sadd.s32 %s201, %s202
      %s204 = smul.addr %s203, 8
      %s205 = scalar_lea.vmem %s4, %s204
      %p206 = scmp.lt.s32.totalorder %s19, 1
      %s207 = scalar_select %p206, %s19, 1
      %s208 = smul.addr %s207, 54
      %s209 = smul.addr %s208, 8
      %s210 = scalar_lea.vmem %s0, %s209
      %s211 = smul.u32 8, %s20
      %p212 = scmp.lt.s32.totalorder %s19, 1
      %s213 = scalar_select %p212, %s19, 1
      %p214 = scmp.lt.s32.totalorder %s211, 31
      %s215 = scalar_select %p214, %s211, 31
      %s216 = smul.addr %s213, 32
      %s217 = sadd.s32 %s215, %s216
      %s218 = smul.addr %s217, 8
      %s219 = scalar_lea.vmem %s4, %s218
      %s220 = smul.u32 8, %s20
      %s221 = smul.u32 %s20, 4
      %s222 = smul.u32 %s221, 24
      %s223 = scalar_lea.vmem %s210, %s222
      %v224 = vld [vmem:[%s223] sm:$0xff]
      %v225 = vld [vmem:[%s223 + $0x8] sm:$0xff]
      %v226 = vld [vmem:[%s223 + $0x10] sm:$0x3]
      %v227 = vld [vmem:[%s223 + $0x18] sm:$0xff]
      %v228 = vld [vmem:[%s223 + $0x20] sm:$0xff]
      %v229 = vld [vmem:[%s223 + $0x28] sm:$0x3]
      %v230 = vld [vmem:[%s223 + $0x30] sm:$0xff]
      %v231 = vld [vmem:[%s223 + $0x38] sm:$0xff]
      %v232 = vld [vmem:[%s223 + $0x40] sm:$0x3]
      %v233 = vld [vmem:[%s223 + $0x48] sm:$0xff]
      %v234 = vld [vmem:[%s223 + $0x50] sm:$0xff]
      %v235 = vld [vmem:[%s223 + $0x58] sm:$0x3]
      %v236 = vld [vmem:[%s1] sm:$0xff]
      %vm249 = vcmask 1046528
      %v250 = vrot.slane %v224, 1
      %v251 = vrot.slane %v225, 1
      %v252 = vsel %vm249, %v250, %v251
      %v253 = vrot.slane %v226, 1
      %v254 = vsel %vm249, %v251, %v253
      %v255 = vrot.slane %v227, 1
      %v256 = vrot.slane %v228, 1
      %v257 = vsel %vm249, %v255, %v256
      %v258 = vrot.slane %v229, 1
      %v259 = vsel %vm249, %v256, %v258
      %v260 = vrot.slane %v230, 1
      %v261 = vrot.slane %v231, 1
      %v262 = vsel %vm249, %v260, %v261
      %v263 = vrot.slane %v232, 1
      %v264 = vsel %vm249, %v261, %v263
      %v265 = vrot.slane %v233, 1
      %v266 = vrot.slane %v234, 1
      %v267 = vsel %vm249, %v265, %v266
      %v268 = vrot.slane %v235, 1
      %v269 = vsel %vm249, %v266, %v268
      %s270 = scalar_lea.vmem %s1, 8
      %v271 = vld [vmem:[%s270] sm:$0xff]
      %vm272 = vcmask 64512
      %v273 = vsel %vm272, %v252, 0
      %v275 = vsel %vm272, %v254, 0
      %v277 = vsel %vm272, %v257, 0
      %v279 = vsel %vm272, %v259, 0
      %v281 = vsel %vm272, %v262, 0
      %v283 = vsel %vm272, %v264, 0
      %v285 = vsel %vm272, %v267, 0
      %v287 = vsel %vm272, %v269, 0
      %289 = vmatprep.subr.mxu0 0.0
      %290 = vmatpush1.msra.mxu0 0.0
      %291 = vmatprep.subr.mxu0 0.0
      %292 = vmatpush1.msra.mxu0 0.0
      %293 = vmatprep.subr.mxu0 0.0
      %294 = vmatpush1.msra.mxu0 0.0
      %295 = vmatprep.subr.mxu0 0.0
      %296 = vmatpush1.msra.mxu0 0.0
      %297 = vmatprep.subr.mxu0 0.0
      %298 = vmatpush1.msra.mxu0 0.0
      %299 = vmatprep.subr.mxu0 0.0
      %300 = vmatpush1.msra.mxu0 0.0
      %301 = vmatprep.subr.mxu0 0.0
      %302 = vmatpush1.msra.mxu0 0.0
      %303 = vmatprep.subr.mxu0 0.0
      %304 = vmatpush1.msra.mxu0 0.0
      %305 = vmatprep.subr.mxu0 0.0
      %306 = vmatpush1.msra.mxu0 0.0
      %307 = vmatprep.subr.mxu0 0.0
      %308 = vmatpush1.msra.mxu0 0.0
      %309 = vmatprep.subr.mxu0 0.0
      %310 = vmatpush1.msra.mxu0 0.0
      %311 = vmatprep.subr.mxu0 0.0
      %312 = vmatpush1.msra.mxu0 0.0
      %313 = vmatprep.subr.mxu0 0.0
      %314 = vmatpush1.msra.mxu0 0.0
      %315 = vmatprep.subr.mxu0 0.0
      %316 = vmatpush1.msra.mxu0 0.0
      %317 = vmatprep.subr.mxu0 0.0
      %318 = vmatpush1.msra.mxu0 0.0
      %319 = vmatprep.subr.mxu0 0.0
      %320 = vmatpush1.msra.mxu0 %v271
      %321 = vmatprep.subr.mxu0 0.0
      %322 = vmatpush2.msra.mxu0 0.0
      %323 = vmatprep.subr.mxu0 0.0
      %324 = vmatpush2.msra.mxu0 0.0
      %325 = vmatprep.subr.mxu0 0.0
      %326 = vmatpush2.msra.mxu0 0.0
      %327 = vmatprep.subr.mxu0 0.0
      %328 = vmatpush2.msra.mxu0 0.0
      %329 = vmatprep.subr.mxu0 0.0
      %330 = vmatpush2.msra.mxu0 0.0
      %331 = vmatprep.subr.mxu0 0.0
      %332 = vmatpush2.msra.mxu0 0.0
      %333 = vmatprep.subr.mxu0 0.0
      %334 = vmatpush2.msra.mxu0 0.0
      %335 = vmatprep.subr.mxu0 0.0
      %336 = vmatpush2.msra.mxu0 0.0
      %337 = vmatprep.subr.mxu0 0.0
      %338 = vmatpush2.msra.mxu0 0.0
      %339 = vmatprep.subr.mxu0 0.0
      %340 = vmatpush2.msra.mxu0 0.0
      %341 = vmatprep.subr.mxu0 0.0
      %342 = vmatpush2.msra.mxu0 0.0
      %343 = vmatprep.subr.mxu0 0.0
      %344 = vmatpush2.msra.mxu0 0.0
      %345 = vmatprep.subr.mxu0 0.0
      %346 = vmatpush2.msra.mxu0 0.0
      %347 = vmatprep.subr.mxu0 0.0
      %348 = vmatpush2.msra.mxu0 0.0
      %349 = vmatprep.subr.mxu0 0.0
      %350 = vmatpush2.msra.mxu0 0.0
      %351 = vmatprep.subr.mxu0 0.0
      %352 = vmatpush2.msra.mxu0 0.0
      %353 = vmatprep.mubr.f32.mxu0 0.0
      %354 = vmatmul.mubr.f32.gmra.mxu0 %v273
      %v355 = vpop.f32.mrf.mxu0
      %v356 = vadd.f32 0.0, %v355
      %v357 = vpop.f32.mrf.mxu0
      %358 = vmatprep.mubr.f32.mxu0 0.0
      %359 = vmatmul.mubr.f32.gmra.mxu0 %v275
      %v360 = vpop.f32.mrf.mxu0
      %v361 = vadd.f32 0.0, %v360
      %v362 = vpop.f32.mrf.mxu0
      %363 = vmatprep.mubr.f32.mxu0 0.0
      %364 = vmatmul.mubr.f32.gmra.mxu0 %v277
      %v365 = vpop.f32.mrf.mxu0
      %v366 = vadd.f32 0.0, %v365
      %v367 = vpop.f32.mrf.mxu0
      %368 = vmatprep.mubr.f32.mxu0 0.0
      %369 = vmatmul.mubr.f32.gmra.mxu0 %v279
      %v370 = vpop.f32.mrf.mxu0
      %v371 = vadd.f32 0.0, %v370
      %v372 = vpop.f32.mrf.mxu0
      %373 = vmatprep.mubr.f32.mxu0 0.0
      %374 = vmatmul.mubr.f32.gmra.mxu0 %v281
      %v375 = vpop.f32.mrf.mxu0
      %v376 = vadd.f32 0.0, %v375
      %v377 = vpop.f32.mrf.mxu0
      %378 = vmatprep.mubr.f32.mxu0 0.0
      %379 = vmatmul.mubr.f32.gmra.mxu0 %v283
      %v380 = vpop.f32.mrf.mxu0
      %v381 = vadd.f32 0.0, %v380
      %v382 = vpop.f32.mrf.mxu0
      %383 = vmatprep.mubr.f32.mxu0 0.0
      %384 = vmatmul.mubr.f32.gmra.mxu0 %v285
      %v385 = vpop.f32.mrf.mxu0
      %v386 = vadd.f32 0.0, %v385
      %v387 = vpop.f32.mrf.mxu0
      %388 = vmatprep.mubr.f32.mxu0 0.0
      %389 = vmatmul.mubr.f32.gmra.mxu0 %v287
      %v390 = vpop.f32.mrf.mxu0
      %v391 = vadd.f32 0.0, %v390
      %v392 = vpop.f32.mrf.mxu0
      %393 = vdwg.mxu0
      %v394 = vsel %vm272, %v224, 0
      %v396 = vsel %vm272, %v225, 0
      %v398 = vsel %vm272, %v227, 0
      %v400 = vsel %vm272, %v228, 0
      %v402 = vsel %vm272, %v230, 0
      %v404 = vsel %vm272, %v231, 0
      %v406 = vsel %vm272, %v233, 0
      %v408 = vsel %vm272, %v234, 0
      %410 = vmatprep.subr.mxu0 0.0
      %411 = vmatpush1.msra.mxu0 0.0
      %412 = vmatprep.subr.mxu0 0.0
      %413 = vmatpush1.msra.mxu0 0.0
      %414 = vmatprep.subr.mxu0 0.0
      %415 = vmatpush1.msra.mxu0 0.0
      %416 = vmatprep.subr.mxu0 0.0
      %417 = vmatpush1.msra.mxu0 0.0
      %418 = vmatprep.subr.mxu0 0.0
      %419 = vmatpush1.msra.mxu0 0.0
      %420 = vmatprep.subr.mxu0 0.0
      %421 = vmatpush1.msra.mxu0 0.0
      %422 = vmatprep.subr.mxu0 0.0
      %423 = vmatpush1.msra.mxu0 0.0
      %424 = vmatprep.subr.mxu0 0.0
      %425 = vmatpush1.msra.mxu0 0.0
      %426 = vmatprep.subr.mxu0 0.0
      %427 = vmatpush1.msra.mxu0 0.0
      %428 = vmatprep.subr.mxu0 0.0
      %429 = vmatpush1.msra.mxu0 0.0
      %430 = vmatprep.subr.mxu0 0.0
      %431 = vmatpush1.msra.mxu0 0.0
      %432 = vmatprep.subr.mxu0 0.0
      %433 = vmatpush1.msra.mxu0 0.0
      %434 = vmatprep.subr.mxu0 0.0
      %435 = vmatpush1.msra.mxu0 0.0
      %436 = vmatprep.subr.mxu0 0.0
      %437 = vmatpush1.msra.mxu0 0.0
      %438 = vmatprep.subr.mxu0 0.0
      %439 = vmatpush1.msra.mxu0 0.0
      %440 = vmatprep.subr.mxu0 0.0
      %441 = vmatpush1.msra.mxu0 %v236
      %442 = vmatprep.subr.mxu0 0.0
      %443 = vmatpush2.msra.mxu0 0.0
      %444 = vmatprep.subr.mxu0 0.0
      %445 = vmatpush2.msra.mxu0 0.0
      %446 = vmatprep.subr.mxu0 0.0
      %447 = vmatpush2.msra.mxu0 0.0
      %448 = vmatprep.subr.mxu0 0.0
      %449 = vmatpush2.msra.mxu0 0.0
      %450 = vmatprep.subr.mxu0 0.0
      %451 = vmatpush2.msra.mxu0 0.0
      %452 = vmatprep.subr.mxu0 0.0
      %453 = vmatpush2.msra.mxu0 0.0
      %454 = vmatprep.subr.mxu0 0.0
      %455 = vmatpush2.msra.mxu0 0.0
      %456 = vmatprep.subr.mxu0 0.0
      %457 = vmatpush2.msra.mxu0 0.0
      %458 = vmatprep.subr.mxu0 0.0
      %459 = vmatpush2.msra.mxu0 0.0
      %460 = vmatprep.subr.mxu0 0.0
      %461 = vmatpush2.msra.mxu0 0.0
      %462 = vmatprep.subr.mxu0 0.0
      %463 = vmatpush2.msra.mxu0 0.0
      %464 = vmatprep.subr.mxu0 0.0
      %465 = vmatpush2.msra.mxu0 0.0
      %466 = vmatprep.subr.mxu0 0.0
      %467 = vmatpush2.msra.mxu0 0.0
      %468 = vmatprep.subr.mxu0 0.0
      %469 = vmatpush2.msra.mxu0 0.0
      %470 = vmatprep.subr.mxu0 0.0
      %471 = vmatpush2.msra.mxu0 0.0
      %472 = vmatprep.subr.mxu0 0.0
      %473 = vmatpush2.msra.mxu0 0.0
      %474 = vmatprep.mubr.f32.mxu0 0.0
      %475 = vmatmul.mubr.f32.gmra.mxu0 %v394
      %v476 = vpop.f32.mrf.mxu0
      %v477 = vadd.f32 %v356, %v476
      %v478 = vpop.f32.mrf.mxu0
      %479 = vmatprep.mubr.f32.mxu0 0.0
      %480 = vmatmul.mubr.f32.gmra.mxu0 %v396
      %v481 = vpop.f32.mrf.mxu0
      %v482 = vadd.f32 %v361, %v481
      %v483 = vpop.f32.mrf.mxu0
      %484 = vmatprep.mubr.f32.mxu0 0.0
      %485 = vmatmul.mubr.f32.gmra.mxu0 %v398
      %v486 = vpop.f32.mrf.mxu0
      %v487 = vadd.f32 %v366, %v486
      %v488 = vpop.f32.mrf.mxu0
      %489 = vmatprep.mubr.f32.mxu0 0.0
      %490 = vmatmul.mubr.f32.gmra.mxu0 %v400
      %v491 = vpop.f32.mrf.mxu0
      %v492 = vadd.f32 %v371, %v491
      %v493 = vpop.f32.mrf.mxu0
      %494 = vmatprep.mubr.f32.mxu0 0.0
      %495 = vmatmul.mubr.f32.gmra.mxu0 %v402
      %v496 = vpop.f32.mrf.mxu0
      %v497 = vadd.f32 %v376, %v496
      %v498 = vpop.f32.mrf.mxu0
      %499 = vmatprep.mubr.f32.mxu0 0.0
      %500 = vmatmul.mubr.f32.gmra.mxu0 %v404
      %v501 = vpop.f32.mrf.mxu0
      %v502 = vadd.f32 %v381, %v501
      %v503 = vpop.f32.mrf.mxu0
      %504 = vmatprep.mubr.f32.mxu0 0.0
      %505 = vmatmul.mubr.f32.gmra.mxu0 %v406
      %v506 = vpop.f32.mrf.mxu0
      %v507 = vadd.f32 %v386, %v506
      %v508 = vpop.f32.mrf.mxu0
      %509 = vmatprep.mubr.f32.mxu0 0.0
      %510 = vmatmul.mubr.f32.gmra.mxu0 %v408
      %v511 = vpop.f32.mrf.mxu0
      %v512 = vadd.f32 %v391, %v511
      %v513 = vpop.f32.mrf.mxu0
      %514 = vdwg.mxu0
      %vm515 = vcmask 1045504
      %v516 = vrot.slane %v224, 2
      %v517 = vrot.slane %v225, 2
      %v518 = vsel %vm515, %v516, %v517
      %v519 = vrot.slane %v226, 2
      %v520 = vsel %vm515, %v517, %v519
      %v521 = vrot.slane %v227, 2
      %v522 = vrot.slane %v228, 2
      %v523 = vsel %vm515, %v521, %v522
      %v524 = vrot.slane %v229, 2
      %v525 = vsel %vm515, %v522, %v524
      %v526 = vrot.slane %v230, 2
      %v527 = vrot.slane %v231, 2
      %v528 = vsel %vm515, %v526, %v527
      %v529 = vrot.slane %v232, 2
      %v530 = vsel %vm515, %v527, %v529
      %v531 = vrot.slane %v233, 2
      %v532 = vrot.slane %v234, 2
      %v533 = vsel %vm515, %v531, %v532
      %v534 = vrot.slane %v235, 2
      %v535 = vsel %vm515, %v532, %v534
      %s536 = scalar_lea.vmem %s1, 16
      %v537 = vld [vmem:[%s536] sm:$0xff]
      %v538 = vsel %vm272, %v518, 0
      %v540 = vsel %vm272, %v520, 0
      %v542 = vsel %vm272, %v523, 0
      %v544 = vsel %vm272, %v525, 0
      %v546 = vsel %vm272, %v528, 0
      %v548 = vsel %vm272, %v530, 0
      %v550 = vsel %vm272, %v533, 0
      %v552 = vsel %vm272, %v535, 0
      %554 = vmatprep.subr.mxu0 0.0
      %555 = vmatpush1.msra.mxu0 0.0
      %556 = vmatprep.subr.mxu0 0.0
      %557 = vmatpush1.msra.mxu0 0.0
      %558 = vmatprep.subr.mxu0 0.0
      %559 = vmatpush1.msra.mxu0 0.0
      %560 = vmatprep.subr.mxu0 0.0
      %561 = vmatpush1.msra.mxu0 0.0
      %562 = vmatprep.subr.mxu0 0.0
      %563 = vmatpush1.msra.mxu0 0.0
      %564 = vmatprep.subr.mxu0 0.0
      %565 = vmatpush1.msra.mxu0 0.0
      %566 = vmatprep.subr.mxu0 0.0
      %567 = vmatpush1.msra.mxu0 0.0
      %568 = vmatprep.subr.mxu0 0.0
      %569 = vmatpush1.msra.mxu0 0.0
      %570 = vmatprep.subr.mxu0 0.0
      %571 = vmatpush1.msra.mxu0 0.0
      %572 = vmatprep.subr.mxu0 0.0
      %573 = vmatpush1.msra.mxu0 0.0
      %574 = vmatprep.subr.mxu0 0.0
      %575 = vmatpush1.msra.mxu0 0.0
      %576 = vmatprep.subr.mxu0 0.0
      %577 = vmatpush1.msra.mxu0 0.0
      %578 = vmatprep.subr.mxu0 0.0
      %579 = vmatpush1.msra.mxu0 0.0
      %580 = vmatprep.subr.mxu0 0.0
      %581 = vmatpush1.msra.mxu0 0.0
      %582 = vmatprep.subr.mxu0 0.0
      %583 = vmatpush1.msra.mxu0 0.0
      %584 = vmatprep.subr.mxu0 0.0
      %585 = vmatpush1.msra.mxu0 %v537
      %586 = vmatprep.subr.mxu0 0.0
      %587 = vmatpush2.msra.mxu0 0.0
      %588 = vmatprep.subr.mxu0 0.0
      %589 = vmatpush2.msra.mxu0 0.0
      %590 = vmatprep.subr.mxu0 0.0
      %591 = vmatpush2.msra.mxu0 0.0
      %592 = vmatprep.subr.mxu0 0.0
      %593 = vmatpush2.msra.mxu0 0.0
      %594 = vmatprep.subr.mxu0 0.0
      %595 = vmatpush2.msra.mxu0 0.0
      %596 = vmatprep.subr.mxu0 0.0
      %597 = vmatpush2.msra.mxu0 0.0
      %598 = vmatprep.subr.mxu0 0.0
      %599 = vmatpush2.msra.mxu0 0.0
      %600 = vmatprep.subr.mxu0 0.0
      %601 = vmatpush2.msra.mxu0 0.0
      %602 = vmatprep.subr.mxu0 0.0
      %603 = vmatpush2.msra.mxu0 0.0
      %604 = vmatprep.subr.mxu0 0.0
      %605 = vmatpush2.msra.mxu0 0.0
      %606 = vmatprep.subr.mxu0 0.0
      %607 = vmatpush2.msra.mxu0 0.0
      %608 = vmatprep.subr.mxu0 0.0
      %609 = vmatpush2.msra.mxu0 0.0
      %610 = vmatprep.subr.mxu0 0.0
      %611 = vmatpush2.msra.mxu0 0.0
      %612 = vmatprep.subr.mxu0 0.0
      %613 = vmatpush2.msra.mxu0 0.0
      %614 = vmatprep.subr.mxu0 0.0
      %615 = vmatpush2.msra.mxu0 0.0
      %616 = vmatprep.subr.mxu0 0.0
      %617 = vmatpush2.msra.mxu0 0.0
      %618 = vmatprep.mubr.f32.mxu0 0.0
      %619 = vmatmul.mubr.f32.gmra.mxu0 %v538
      %v620 = vpop.f32.mrf.mxu0
      %v621 = vadd.f32 0.0, %v620
      %v622 = vpop.f32.mrf.mxu0
      %623 = vmatprep.mubr.f32.mxu0 0.0
      %624 = vmatmul.mubr.f32.gmra.mxu0 %v540
      %v625 = vpop.f32.mrf.mxu0
      %v626 = vadd.f32 0.0, %v625
      %v627 = vpop.f32.mrf.mxu0
      %628 = vmatprep.mubr.f32.mxu0 0.0
      %629 = vmatmul.mubr.f32.gmra.mxu0 %v542
      %v630 = vpop.f32.mrf.mxu0
      %v631 = vadd.f32 0.0, %v630
      %v632 = vpop.f32.mrf.mxu0
      %633 = vmatprep.mubr.f32.mxu0 0.0
      %634 = vmatmul.mubr.f32.gmra.mxu0 %v544
      %v635 = vpop.f32.mrf.mxu0
      %v636 = vadd.f32 0.0, %v635
      %v637 = vpop.f32.mrf.mxu0
      %638 = vmatprep.mubr.f32.mxu0 0.0
      %639 = vmatmul.mubr.f32.gmra.mxu0 %v546
      %v640 = vpop.f32.mrf.mxu0
      %v641 = vadd.f32 0.0, %v640
      %v642 = vpop.f32.mrf.mxu0
      %643 = vmatprep.mubr.f32.mxu0 0.0
      %644 = vmatmul.mubr.f32.gmra.mxu0 %v548
      %v645 = vpop.f32.mrf.mxu0
      %v646 = vadd.f32 0.0, %v645
      %v647 = vpop.f32.mrf.mxu0
      %648 = vmatprep.mubr.f32.mxu0 0.0
      %649 = vmatmul.mubr.f32.gmra.mxu0 %v550
      %v650 = vpop.f32.mrf.mxu0
      %v651 = vadd.f32 0.0, %v650
      %v652 = vpop.f32.mrf.mxu0
      %653 = vmatprep.mubr.f32.mxu0 0.0
      %654 = vmatmul.mubr.f32.gmra.mxu0 %v552
      %v655 = vpop.f32.mrf.mxu0
      %v656 = vadd.f32 0.0, %v655
      %v657 = vpop.f32.mrf.mxu0
      %658 = vdwg.mxu0
      %v659 = vadd.f32 %v477, %v621
      %v660 = vadd.f32 %v482, %v626
      %v661 = vadd.f32 %v487, %v631
      %v662 = vadd.f32 %v492, %v636
      %v663 = vadd.f32 %v497, %v641
      %v664 = vadd.f32 %v502, %v646
      %v665 = vadd.f32 %v507, %v651
      %v666 = vadd.f32 %v512, %v656
      %s667 = sadd.s32 %s221, 1
      %s668 = smul.u32 %s667, 24
      %s669 = scalar_lea.vmem %s210, %s668
      %v670 = vld [vmem:[%s669] sm:$0xff]
      %v671 = vld [vmem:[%s669 + $0x8] sm:$0xff]
      %v672 = vld [vmem:[%s669 + $0x10] sm:$0x3]
      %v673 = vld [vmem:[%s669 + $0x18] sm:$0xff]
      %v674 = vld [vmem:[%s669 + $0x20] sm:$0xff]
      %v675 = vld [vmem:[%s669 + $0x28] sm:$0x3]
      %v676 = vld [vmem:[%s669 + $0x30] sm:$0xff]
      %v677 = vld [vmem:[%s669 + $0x38] sm:$0xff]
      %v678 = vld [vmem:[%s669 + $0x40] sm:$0x3]
      %v679 = vld [vmem:[%s669 + $0x48] sm:$0xff]
      %v680 = vld [vmem:[%s669 + $0x50] sm:$0xff]
      %v681 = vld [vmem:[%s669 + $0x58] sm:$0x3]
      %s682 = scalar_lea.vmem %s1, 24
      %v683 = vld [vmem:[%s682] sm:$0xff]
      %v685 = vsel %vm272, %v670, 0
      %v688 = vsel %vm272, %v671, 0
      %v691 = vsel %vm272, %v673, 0
      %v694 = vsel %vm272, %v674, 0
      %v697 = vsel %vm272, %v676, 0
      %v700 = vsel %vm272, %v677, 0
      %v703 = vsel %vm272, %v679, 0
      %v706 = vsel %vm272, %v680, 0
      %708 = vmatprep.subr.mxu0 0.0
      %709 = vmatpush1.msra.mxu0 0.0
      %710 = vmatprep.subr.mxu0 0.0
      %711 = vmatpush1.msra.mxu0 0.0
      %712 = vmatprep.subr.mxu0 0.0
      %713 = vmatpush1.msra.mxu0 0.0
      %714 = vmatprep.subr.mxu0 0.0
      %715 = vmatpush1.msra.mxu0 0.0
      %716 = vmatprep.subr.mxu0 0.0
      %717 = vmatpush1.msra.mxu0 0.0
      %718 = vmatprep.subr.mxu0 0.0
      %719 = vmatpush1.msra.mxu0 0.0
      %720 = vmatprep.subr.mxu0 0.0
      %721 = vmatpush1.msra.mxu0 0.0
      %722 = vmatprep.subr.mxu0 0.0
      %723 = vmatpush1.msra.mxu0 0.0
      %724 = vmatprep.subr.mxu0 0.0
      %725 = vmatpush1.msra.mxu0 0.0
      %726 = vmatprep.subr.mxu0 0.0
      %727 = vmatpush1.msra.mxu0 0.0
      %728 = vmatprep.subr.mxu0 0.0
      %729 = vmatpush1.msra.mxu0 0.0
      %730 = vmatprep.subr.mxu0 0.0
      %731 = vmatpush1.msra.mxu0 0.0
      %732 = vmatprep.subr.mxu0 0.0
      %733 = vmatpush1.msra.mxu0 0.0
      %734 = vmatprep.subr.mxu0 0.0
      %735 = vmatpush1.msra.mxu0 0.0
      %736 = vmatprep.subr.mxu0 0.0
      %737 = vmatpush1.msra.mxu0 0.0
      %738 = vmatprep.subr.mxu0 0.0
      %739 = vmatpush1.msra.mxu0 %v683
      %740 = vmatprep.subr.mxu0 0.0
      %741 = vmatpush2.msra.mxu0 0.0
      %742 = vmatprep.subr.mxu0 0.0
      %743 = vmatpush2.msra.mxu0 0.0
      %744 = vmatprep.subr.mxu0 0.0
      %745 = vmatpush2.msra.mxu0 0.0
      %746 = vmatprep.subr.mxu0 0.0
      %747 = vmatpush2.msra.mxu0 0.0
      %748 = vmatprep.subr.mxu0 0.0
      %749 = vmatpush2.msra.mxu0 0.0
      %750 = vmatprep.subr.mxu0 0.0
      %751 = vmatpush2.msra.mxu0 0.0
      %752 = vmatprep.subr.mxu0 0.0
      %753 = vmatpush2.msra.mxu0 0.0
      %754 = vmatprep.subr.mxu0 0.0
      %755 = vmatpush2.msra.mxu0 0.0
      %756 = vmatprep.subr.mxu0 0.0
      %757 = vmatpush2.msra.mxu0 0.0
      %758 = vmatprep.subr.mxu0 0.0
      %759 = vmatpush2.msra.mxu0 0.0
      %760 = vmatprep.subr.mxu0 0.0
      %761 = vmatpush2.msra.mxu0 0.0
      %762 = vmatprep.subr.mxu0 0.0
      %763 = vmatpush2.msra.mxu0 0.0
      %764 = vmatprep.subr.mxu0 0.0
      %765 = vmatpush2.msra.mxu0 0.0
      %766 = vmatprep.subr.mxu0 0.0
      %767 = vmatpush2.msra.mxu0 0.0
      %768 = vmatprep.subr.mxu0 0.0
      %769 = vmatpush2.msra.mxu0 0.0
      %770 = vmatprep.subr.mxu0 0.0
      %771 = vmatpush2.msra.mxu0 0.0
      %772 = vmatprep.mubr.f32.mxu0 0.0
      %773 = vmatmul.mubr.f32.gmra.mxu0 %v685
      %v774 = vpop.f32.mrf.mxu0
      %v775 = vadd.f32 0.0, %v774
      %v776 = vpop.f32.mrf.mxu0
      %777 = vmatprep.mubr.f32.mxu0 0.0
      %778 = vmatmul.mubr.f32.gmra.mxu0 %v688
      %v779 = vpop.f32.mrf.mxu0
      %v780 = vadd.f32 0.0, %v779
      %v781 = vpop.f32.mrf.mxu0
      %782 = vmatprep.mubr.f32.mxu0 0.0
      %783 = vmatmul.mubr.f32.gmra.mxu0 %v691
      %v784 = vpop.f32.mrf.mxu0
      %v785 = vadd.f32 0.0, %v784
      %v786 = vpop.f32.mrf.mxu0
      %787 = vmatprep.mubr.f32.mxu0 0.0
      %788 = vmatmul.mubr.f32.gmra.mxu0 %v694
      %v789 = vpop.f32.mrf.mxu0
      %v790 = vadd.f32 0.0, %v789
      %v791 = vpop.f32.mrf.mxu0
      %792 = vmatprep.mubr.f32.mxu0 0.0
      %793 = vmatmul.mubr.f32.gmra.mxu0 %v697
      %v794 = vpop.f32.mrf.mxu0
      %v795 = vadd.f32 0.0, %v794
      %v796 = vpop.f32.mrf.mxu0
      %797 = vmatprep.mubr.f32.mxu0 0.0
      %798 = vmatmul.mubr.f32.gmra.mxu0 %v700
      %v799 = vpop.f32.mrf.mxu0
      %v800 = vadd.f32 0.0, %v799
      %v801 = vpop.f32.mrf.mxu0
      %802 = vmatprep.mubr.f32.mxu0 0.0
      %803 = vmatmul.mubr.f32.gmra.mxu0 %v703
      %v804 = vpop.f32.mrf.mxu0
      %v805 = vadd.f32 0.0, %v804
      %v806 = vpop.f32.mrf.mxu0
      %807 = vmatprep.mubr.f32.mxu0 0.0
      %808 = vmatmul.mubr.f32.gmra.mxu0 %v706
      %v809 = vpop.f32.mrf.mxu0
      %v810 = vadd.f32 0.0, %v809
      %v811 = vpop.f32.mrf.mxu0
      %812 = vdwg.mxu0
      %v813 = vadd.f32 %v659, %v775
      %v814 = vadd.f32 %v660, %v780
      %v815 = vadd.f32 %v661, %v785
      %v816 = vadd.f32 %v662, %v790
      %v817 = vadd.f32 %v663, %v795
      %v818 = vadd.f32 %v664, %v800
      %v819 = vadd.f32 %v665, %v805
      %v820 = vadd.f32 %v666, %v810
      %v825 = vrot.slane %v670, 1
      %v826 = vrot.slane %v671, 1
      %v827 = vsel %vm249, %v825, %v826
      %v828 = vrot.slane %v672, 1
      %v829 = vsel %vm249, %v826, %v828
      %v830 = vrot.slane %v673, 1
      %v831 = vrot.slane %v674, 1
      %v832 = vsel %vm249, %v830, %v831
      %v833 = vrot.slane %v675, 1
      %v834 = vsel %vm249, %v831, %v833
      %v835 = vrot.slane %v676, 1
      %v836 = vrot.slane %v677, 1
      %v837 = vsel %vm249, %v835, %v836
      %v838 = vrot.slane %v678, 1
      %v839 = vsel %vm249, %v836, %v838
      %v840 = vrot.slane %v679, 1
      %v841 = vrot.slane %v680, 1
      %v842 = vsel %vm249, %v840, %v841
      %v843 = vrot.slane %v681, 1
      %v844 = vsel %vm249, %v841, %v843
      %s845 = scalar_lea.vmem %s1, 32
      %v846 = vld [vmem:[%s845] sm:$0xff]
      %v847 = vsel %vm272, %v827, 0
      %v849 = vsel %vm272, %v829, 0
      %v851 = vsel %vm272, %v832, 0
      %v853 = vsel %vm272, %v834, 0
      %v855 = vsel %vm272, %v837, 0
      %v857 = vsel %vm272, %v839, 0
      %v859 = vsel %vm272, %v842, 0
      %v861 = vsel %vm272, %v844, 0
      %863 = vmatprep.subr.mxu0 0.0
      %864 = vmatpush1.msra.mxu0 0.0
      %865 = vmatprep.subr.mxu0 0.0
      %866 = vmatpush1.msra.mxu0 0.0
      %867 = vmatprep.subr.mxu0 0.0
      %868 = vmatpush1.msra.mxu0 0.0
      %869 = vmatprep.subr.mxu0 0.0
      %870 = vmatpush1.msra.mxu0 0.0
      %871 = vmatprep.subr.mxu0 0.0
      %872 = vmatpush1.msra.mxu0 0.0
      %873 = vmatprep.subr.mxu0 0.0
      %874 = vmatpush1.msra.mxu0 0.0
      %875 = vmatprep.subr.mxu0 0.0
      %876 = vmatpush1.msra.mxu0 0.0
      %877 = vmatprep.subr.mxu0 0.0
      %878 = vmatpush1.msra.mxu0 0.0
      %879 = vmatprep.subr.mxu0 0.0
      %880 = vmatpush1.msra.mxu0 0.0
      %881 = vmatprep.subr.mxu0 0.0
      %882 = vmatpush1.msra.mxu0 0.0
      %883 = vmatprep.subr.mxu0 0.0
      %884 = vmatpush1.msra.mxu0 0.0
      %885 = vmatprep.subr.mxu0 0.0
      %886 = vmatpush1.msra.mxu0 0.0
      %887 = vmatprep.subr.mxu0 0.0
      %888 = vmatpush1.msra.mxu0 0.0
      %889 = vmatprep.subr.mxu0 0.0
      %890 = vmatpush1.msra.mxu0 0.0
      %891 = vmatprep.subr.mxu0 0.0
      %892 = vmatpush1.msra.mxu0 0.0
      %893 = vmatprep.subr.mxu0 0.0
      %894 = vmatpush1.msra.mxu0 %v846
      %895 = vmatprep.subr.mxu0 0.0
      %896 = vmatpush2.msra.mxu0 0.0
      %897 = vmatprep.subr.mxu0 0.0
      %898 = vmatpush2.msra.mxu0 0.0
      %899 = vmatprep.subr.mxu0 0.0
      %900 = vmatpush2.msra.mxu0 0.0
      %901 = vmatprep.subr.mxu0 0.0
      %902 = vmatpush2.msra.mxu0 0.0
      %903 = vmatprep.subr.mxu0 0.0
      %904 = vmatpush2.msra.mxu0 0.0
      %905 = vmatprep.subr.mxu0 0.0
      %906 = vmatpush2.msra.mxu0 0.0
      %907 = vmatprep.subr.mxu0 0.0
      %908 = vmatpush2.msra.mxu0 0.0
      %909 = vmatprep.subr.mxu0 0.0
      %910 = vmatpush2.msra.mxu0 0.0
      %911 = vmatprep.subr.mxu0 0.0
      %912 = vmatpush2.msra.mxu0 0.0
      %913 = vmatprep.subr.mxu0 0.0
      %914 = vmatpush2.msra.mxu0 0.0
      %915 = vmatprep.subr.mxu0 0.0
      %916 = vmatpush2.msra.mxu0 0.0
      %917 = vmatprep.subr.mxu0 0.0
      %918 = vmatpush2.msra.mxu0 0.0
      %919 = vmatprep.subr.mxu0 0.0
      %920 = vmatpush2.msra.mxu0 0.0
      %921 = vmatprep.subr.mxu0 0.0
      %922 = vmatpush2.msra.mxu0 0.0
      %923 = vmatprep.subr.mxu0 0.0
      %924 = vmatpush2.msra.mxu0 0.0
      %925 = vmatprep.subr.mxu0 0.0
      %926 = vmatpush2.msra.mxu0 0.0
      %927 = vmatprep.mubr.f32.mxu0 0.0
      %928 = vmatmul.mubr.f32.gmra.mxu0 %v847
      %v929 = vpop.f32.mrf.mxu0
      %v930 = vadd.f32 0.0, %v929
      %v931 = vpop.f32.mrf.mxu0
      %932 = vmatprep.mubr.f32.mxu0 0.0
      %933 = vmatmul.mubr.f32.gmra.mxu0 %v849
      %v934 = vpop.f32.mrf.mxu0
      %v935 = vadd.f32 0.0, %v934
      %v936 = vpop.f32.mrf.mxu0
      %937 = vmatprep.mubr.f32.mxu0 0.0
      %938 = vmatmul.mubr.f32.gmra.mxu0 %v851
      %v939 = vpop.f32.mrf.mxu0
      %v940 = vadd.f32 0.0, %v939
      %v941 = vpop.f32.mrf.mxu0
      %942 = vmatprep.mubr.f32.mxu0 0.0
      %943 = vmatmul.mubr.f32.gmra.mxu0 %v853
      %v944 = vpop.f32.mrf.mxu0
      %v945 = vadd.f32 0.0, %v944
      %v946 = vpop.f32.mrf.mxu0
      %947 = vmatprep.mubr.f32.mxu0 0.0
      %948 = vmatmul.mubr.f32.gmra.mxu0 %v855
      %v949 = vpop.f32.mrf.mxu0
      %v950 = vadd.f32 0.0, %v949
      %v951 = vpop.f32.mrf.mxu0
      %952 = vmatprep.mubr.f32.mxu0 0.0
      %953 = vmatmul.mubr.f32.gmra.mxu0 %v857
      %v954 = vpop.f32.mrf.mxu0
      %v955 = vadd.f32 0.0, %v954
      %v956 = vpop.f32.mrf.mxu0
      %957 = vmatprep.mubr.f32.mxu0 0.0
      %958 = vmatmul.mubr.f32.gmra.mxu0 %v859
      %v959 = vpop.f32.mrf.mxu0
      %v960 = vadd.f32 0.0, %v959
      %v961 = vpop.f32.mrf.mxu0
      %962 = vmatprep.mubr.f32.mxu0 0.0
      %963 = vmatmul.mubr.f32.gmra.mxu0 %v861
      %v964 = vpop.f32.mrf.mxu0
      %v965 = vadd.f32 0.0, %v964
      %v966 = vpop.f32.mrf.mxu0
      %967 = vdwg.mxu0
      %v968 = vadd.f32 %v813, %v930
      %v969 = vadd.f32 %v814, %v935
      %v970 = vadd.f32 %v815, %v940
      %v971 = vadd.f32 %v816, %v945
      %v972 = vadd.f32 %v817, %v950
      %v973 = vadd.f32 %v818, %v955
      %v974 = vadd.f32 %v819, %v960
      %v975 = vadd.f32 %v820, %v965
      %v976 = vrot.slane %v670, 2
      %v977 = vrot.slane %v671, 2
      %v978 = vsel %vm515, %v976, %v977
      %v979 = vrot.slane %v672, 2
      %v980 = vsel %vm515, %v977, %v979
      %v981 = vrot.slane %v673, 2
      %v982 = vrot.slane %v674, 2
      %v983 = vsel %vm515, %v981, %v982
      %v984 = vrot.slane %v675, 2
      %v985 = vsel %vm515, %v982, %v984
      %v986 = vrot.slane %v676, 2
      %v987 = vrot.slane %v677, 2
      %v988 = vsel %vm515, %v986, %v987
      %v989 = vrot.slane %v678, 2
      %v990 = vsel %vm515, %v987, %v989
      %v991 = vrot.slane %v679, 2
      %v992 = vrot.slane %v680, 2
      %v993 = vsel %vm515, %v991, %v992
      %v994 = vrot.slane %v681, 2
      %v995 = vsel %vm515, %v992, %v994
      %s996 = scalar_lea.vmem %s1, 40
      %v997 = vld [vmem:[%s996] sm:$0xff]
      %v998 = vsel %vm272, %v978, 0
      %v1000 = vsel %vm272, %v980, 0
      %v1002 = vsel %vm272, %v983, 0
      %v1004 = vsel %vm272, %v985, 0
      %v1006 = vsel %vm272, %v988, 0
      %v1008 = vsel %vm272, %v990, 0
      %v1010 = vsel %vm272, %v993, 0
      %v1012 = vsel %vm272, %v995, 0
      %1014 = vmatprep.subr.mxu0 0.0
      %1015 = vmatpush1.msra.mxu0 0.0
      %1016 = vmatprep.subr.mxu0 0.0
      %1017 = vmatpush1.msra.mxu0 0.0
      %1018 = vmatprep.subr.mxu0 0.0
      %1019 = vmatpush1.msra.mxu0 0.0
      %1020 = vmatprep.subr.mxu0 0.0
      %1021 = vmatpush1.msra.mxu0 0.0
      %1022 = vmatprep.subr.mxu0 0.0
      %1023 = vmatpush1.msra.mxu0 0.0
      %1024 = vmatprep.subr.mxu0 0.0
      %1025 = vmatpush1.msra.mxu0 0.0
      %1026 = vmatprep.subr.mxu0 0.0
      %1027 = vmatpush1.msra.mxu0 0.0
      %1028 = vmatprep.subr.mxu0 0.0
      %1029 = vmatpush1.msra.mxu0 0.0
      %1030 = vmatprep.subr.mxu0 0.0
      %1031 = vmatpush1.msra.mxu0 0.0
      %1032 = vmatprep.subr.mxu0 0.0
      %1033 = vmatpush1.msra.mxu0 0.0
      %1034 = vmatprep.subr.mxu0 0.0
      %1035 = vmatpush1.msra.mxu0 0.0
      %1036 = vmatprep.subr.mxu0 0.0
      %1037 = vmatpush1.msra.mxu0 0.0
      %1038 = vmatprep.subr.mxu0 0.0
      %1039 = vmatpush1.msra.mxu0 0.0
      %1040 = vmatprep.subr.mxu0 0.0
      %1041 = vmatpush1.msra.mxu0 0.0
      %1042 = vmatprep.subr.mxu0 0.0
      %1043 = vmatpush1.msra.mxu0 0.0
      %1044 = vmatprep.subr.mxu0 0.0
      %1045 = vmatpush1.msra.mxu0 %v997
      %1046 = vmatprep.subr.mxu0 0.0
      %1047 = vmatpush2.msra.mxu0 0.0
      %1048 = vmatprep.subr.mxu0 0.0
      %1049 = vmatpush2.msra.mxu0 0.0
      %1050 = vmatprep.subr.mxu0 0.0
      %1051 = vmatpush2.msra.mxu0 0.0
      %1052 = vmatprep.subr.mxu0 0.0
      %1053 = vmatpush2.msra.mxu0 0.0
      %1054 = vmatprep.subr.mxu0 0.0
      %1055 = vmatpush2.msra.mxu0 0.0
      %1056 = vmatprep.subr.mxu0 0.0
      %1057 = vmatpush2.msra.mxu0 0.0
      %1058 = vmatprep.subr.mxu0 0.0
      %1059 = vmatpush2.msra.mxu0 0.0
      %1060 = vmatprep.subr.mxu0 0.0
      %1061 = vmatpush2.msra.mxu0 0.0
      %1062 = vmatprep.subr.mxu0 0.0
      %1063 = vmatpush2.msra.mxu0 0.0
      %1064 = vmatprep.subr.mxu0 0.0
      %1065 = vmatpush2.msra.mxu0 0.0
      %1066 = vmatprep.subr.mxu0 0.0
      %1067 = vmatpush2.msra.mxu0 0.0
      %1068 = vmatprep.subr.mxu0 0.0
      %1069 = vmatpush2.msra.mxu0 0.0
      %1070 = vmatprep.subr.mxu0 0.0
      %1071 = vmatpush2.msra.mxu0 0.0
      %1072 = vmatprep.subr.mxu0 0.0
      %1073 = vmatpush2.msra.mxu0 0.0
      %1074 = vmatprep.subr.mxu0 0.0
      %1075 = vmatpush2.msra.mxu0 0.0
      %1076 = vmatprep.subr.mxu0 0.0
      %1077 = vmatpush2.msra.mxu0 0.0
      %1078 = vmatprep.mubr.f32.mxu0 0.0
      %1079 = vmatmul.mubr.f32.gmra.mxu0 %v998
      %v1080 = vpop.f32.mrf.mxu0
      %v1081 = vadd.f32 0.0, %v1080
      %v1082 = vpop.f32.mrf.mxu0
      %1083 = vmatprep.mubr.f32.mxu0 0.0
      %1084 = vmatmul.mubr.f32.gmra.mxu0 %v1000
      %v1085 = vpop.f32.mrf.mxu0
      %v1086 = vadd.f32 0.0, %v1085
      %v1087 = vpop.f32.mrf.mxu0
      %1088 = vmatprep.mubr.f32.mxu0 0.0
      %1089 = vmatmul.mubr.f32.gmra.mxu0 %v1002
      %v1090 = vpop.f32.mrf.mxu0
      %v1091 = vadd.f32 0.0, %v1090
      %v1092 = vpop.f32.mrf.mxu0
      %1093 = vmatprep.mubr.f32.mxu0 0.0
      %1094 = vmatmul.mubr.f32.gmra.mxu0 %v1004
      %v1095 = vpop.f32.mrf.mxu0
      %v1096 = vadd.f32 0.0, %v1095
      %v1097 = vpop.f32.mrf.mxu0
      %1098 = vmatprep.mubr.f32.mxu0 0.0
      %1099 = vmatmul.mubr.f32.gmra.mxu0 %v1006
      %v1100 = vpop.f32.mrf.mxu0
      %v1101 = vadd.f32 0.0, %v1100
      %v1102 = vpop.f32.mrf.mxu0
      %1103 = vmatprep.mubr.f32.mxu0 0.0
      %1104 = vmatmul.mubr.f32.gmra.mxu0 %v1008
      %v1105 = vpop.f32.mrf.mxu0
      %v1106 = vadd.f32 0.0, %v1105
      %v1107 = vpop.f32.mrf.mxu0
      %1108 = vmatprep.mubr.f32.mxu0 0.0
      %1109 = vmatmul.mubr.f32.gmra.mxu0 %v1010
      %v1110 = vpop.f32.mrf.mxu0
      %v1111 = vadd.f32 0.0, %v1110
      %v1112 = vpop.f32.mrf.mxu0
      %1113 = vmatprep.mubr.f32.mxu0 0.0
      %1114 = vmatmul.mubr.f32.gmra.mxu0 %v1012
      %v1115 = vpop.f32.mrf.mxu0
      %v1116 = vadd.f32 0.0, %v1115
      %v1117 = vpop.f32.mrf.mxu0
      %1118 = vdwg.mxu0
      %v1119 = vadd.f32 %v968, %v1081
      %v1120 = vadd.f32 %v969, %v1086
      %v1121 = vadd.f32 %v970, %v1091
      %v1122 = vadd.f32 %v971, %v1096
      %v1123 = vadd.f32 %v972, %v1101
      %v1124 = vadd.f32 %v973, %v1106
      %v1125 = vadd.f32 %v974, %v1111
      %v1126 = vadd.f32 %v975, %v1116
      %s1127 = sadd.s32 %s221, 2
      %s1128 = smul.u32 %s1127, 24
      %s1129 = scalar_lea.vmem %s210, %s1128
      %v1130 = vld [vmem:[%s1129] sm:$0xff]
      %v1131 = vld [vmem:[%s1129 + $0x8] sm:$0xff]
      %v1132 = vld [vmem:[%s1129 + $0x10] sm:$0x3]
      %v1133 = vld [vmem:[%s1129 + $0x18] sm:$0xff]
      %v1134 = vld [vmem:[%s1129 + $0x20] sm:$0xff]
      %v1135 = vld [vmem:[%s1129 + $0x28] sm:$0x3]
      %v1136 = vld [vmem:[%s1129 + $0x30] sm:$0xff]
      %v1137 = vld [vmem:[%s1129 + $0x38] sm:$0xff]
      %v1138 = vld [vmem:[%s1129 + $0x40] sm:$0x3]
      %v1139 = vld [vmem:[%s1129 + $0x48] sm:$0xff]
      %v1140 = vld [vmem:[%s1129 + $0x50] sm:$0xff]
      %v1141 = vld [vmem:[%s1129 + $0x58] sm:$0x3]
      %s1142 = scalar_lea.vmem %s1, 48
      %v1143 = vld [vmem:[%s1142] sm:$0xff]
      %v1145 = vsel %vm272, %v1130, 0
      %v1148 = vsel %vm272, %v1131, 0
      %v1151 = vsel %vm272, %v1133, 0
      %v1154 = vsel %vm272, %v1134, 0
      %v1157 = vsel %vm272, %v1136, 0
      %v1160 = vsel %vm272, %v1137, 0
      %v1163 = vsel %vm272, %v1139, 0
      %v1166 = vsel %vm272, %v1140, 0
      %1168 = vmatprep.subr.mxu0 0.0
      %1169 = vmatpush1.msra.mxu0 0.0
      %1170 = vmatprep.subr.mxu0 0.0
      %1171 = vmatpush1.msra.mxu0 0.0
      %1172 = vmatprep.subr.mxu0 0.0
      %1173 = vmatpush1.msra.mxu0 0.0
      %1174 = vmatprep.subr.mxu0 0.0
      %1175 = vmatpush1.msra.mxu0 0.0
      %1176 = vmatprep.subr.mxu0 0.0
      %1177 = vmatpush1.msra.mxu0 0.0
      %1178 = vmatprep.subr.mxu0 0.0
      %1179 = vmatpush1.msra.mxu0 0.0
      %1180 = vmatprep.subr.mxu0 0.0
      %1181 = vmatpush1.msra.mxu0 0.0
      %1182 = vmatprep.subr.mxu0 0.0
      %1183 = vmatpush1.msra.mxu0 0.0
      %1184 = vmatprep.subr.mxu0 0.0
      %1185 = vmatpush1.msra.mxu0 0.0
      %1186 = vmatprep.subr.mxu0 0.0
      %1187 = vmatpush1.msra.mxu0 0.0
      %1188 = vmatprep.subr.mxu0 0.0
      %1189 = vmatpush1.msra.mxu0 0.0
      %1190 = vmatprep.subr.mxu0 0.0
      %1191 = vmatpush1.msra.mxu0 0.0
      %1192 = vmatprep.subr.mxu0 0.0
      %1193 = vmatpush1.msra.mxu0 0.0
      %1194 = vmatprep.subr.mxu0 0.0
      %1195 = vmatpush1.msra.mxu0 0.0
      %1196 = vmatprep.subr.mxu0 0.0
      %1197 = vmatpush1.msra.mxu0 0.0
      %1198 = vmatprep.subr.mxu0 0.0
      %1199 = vmatpush1.msra.mxu0 %v1143
      %1200 = vmatprep.subr.mxu0 0.0
      %1201 = vmatpush2.msra.mxu0 0.0
      %1202 = vmatprep.subr.mxu0 0.0
      %1203 = vmatpush2.msra.mxu0 0.0
      %1204 = vmatprep.subr.mxu0 0.0
      %1205 = vmatpush2.msra.mxu0 0.0
      %1206 = vmatprep.subr.mxu0 0.0
      %1207 = vmatpush2.msra.mxu0 0.0
      %1208 = vmatprep.subr.mxu0 0.0
      %1209 = vmatpush2.msra.mxu0 0.0
      %1210 = vmatprep.subr.mxu0 0.0
      %1211 = vmatpush2.msra.mxu0 0.0
      %1212 = vmatprep.subr.mxu0 0.0
      %1213 = vmatpush2.msra.mxu0 0.0
      %1214 = vmatprep.subr.mxu0 0.0
      %1215 = vmatpush2.msra.mxu0 0.0
      %1216 = vmatprep.subr.mxu0 0.0
      %1217 = vmatpush2.msra.mxu0 0.0
      %1218 = vmatprep.subr.mxu0 0.0
      %1219 = vmatpush2.msra.mxu0 0.0
      %1220 = vmatprep.subr.mxu0 0.0
      %1221 = vmatpush2.msra.mxu0 0.0
      %1222 = vmatprep.subr.mxu0 0.0
      %1223 = vmatpush2.msra.mxu0 0.0
      %1224 = vmatprep.subr.mxu0 0.0
      %1225 = vmatpush2.msra.mxu0 0.0
      %1226 = vmatprep.subr.mxu0 0.0
      %1227 = vmatpush2.msra.mxu0 0.0
      %1228 = vmatprep.subr.mxu0 0.0
      %1229 = vmatpush2.msra.mxu0 0.0
      %1230 = vmatprep.subr.mxu0 0.0
      %1231 = vmatpush2.msra.mxu0 0.0
      %1232 = vmatprep.mubr.f32.mxu0 0.0
      %1233 = vmatmul.mubr.f32.gmra.mxu0 %v1145
      %v1234 = vpop.f32.mrf.mxu0
      %v1235 = vadd.f32 0.0, %v1234
      %v1236 = vpop.f32.mrf.mxu0
      %1237 = vmatprep.mubr.f32.mxu0 0.0
      %1238 = vmatmul.mubr.f32.gmra.mxu0 %v1148
      %v1239 = vpop.f32.mrf.mxu0
      %v1240 = vadd.f32 0.0, %v1239
      %v1241 = vpop.f32.mrf.mxu0
      %1242 = vmatprep.mubr.f32.mxu0 0.0
      %1243 = vmatmul.mubr.f32.gmra.mxu0 %v1151
      %v1244 = vpop.f32.mrf.mxu0
      %v1245 = vadd.f32 0.0, %v1244
      %v1246 = vpop.f32.mrf.mxu0
      %1247 = vmatprep.mubr.f32.mxu0 0.0
      %1248 = vmatmul.mubr.f32.gmra.mxu0 %v1154
      %v1249 = vpop.f32.mrf.mxu0
      %v1250 = vadd.f32 0.0, %v1249
      %v1251 = vpop.f32.mrf.mxu0
      %1252 = vmatprep.mubr.f32.mxu0 0.0
      %1253 = vmatmul.mubr.f32.gmra.mxu0 %v1157
      %v1254 = vpop.f32.mrf.mxu0
      %v1255 = vadd.f32 0.0, %v1254
      %v1256 = vpop.f32.mrf.mxu0
      %1257 = vmatprep.mubr.f32.mxu0 0.0
      %1258 = vmatmul.mubr.f32.gmra.mxu0 %v1160
      %v1259 = vpop.f32.mrf.mxu0
      %v1260 = vadd.f32 0.0, %v1259
      %v1261 = vpop.f32.mrf.mxu0
      %1262 = vmatprep.mubr.f32.mxu0 0.0
      %1263 = vmatmul.mubr.f32.gmra.mxu0 %v1163
      %v1264 = vpop.f32.mrf.mxu0
      %v1265 = vadd.f32 0.0, %v1264
      %v1266 = vpop.f32.mrf.mxu0
      %1267 = vmatprep.mubr.f32.mxu0 0.0
      %1268 = vmatmul.mubr.f32.gmra.mxu0 %v1166
      %v1269 = vpop.f32.mrf.mxu0
      %v1270 = vadd.f32 0.0, %v1269
      %v1271 = vpop.f32.mrf.mxu0
      %1272 = vdwg.mxu0
      %v1273 = vadd.f32 %v1119, %v1235
      %v1274 = vadd.f32 %v1120, %v1240
      %v1275 = vadd.f32 %v1121, %v1245
      %v1276 = vadd.f32 %v1122, %v1250
      %v1277 = vadd.f32 %v1123, %v1255
      %v1278 = vadd.f32 %v1124, %v1260
      %v1279 = vadd.f32 %v1125, %v1265
      %v1280 = vadd.f32 %v1126, %v1270
      %v1285 = vrot.slane %v1130, 1
      %v1286 = vrot.slane %v1131, 1
      %v1287 = vsel %vm249, %v1285, %v1286
      %v1288 = vrot.slane %v1132, 1
      %v1289 = vsel %vm249, %v1286, %v1288
      %v1290 = vrot.slane %v1133, 1
      %v1291 = vrot.slane %v1134, 1
      %v1292 = vsel %vm249, %v1290, %v1291
      %v1293 = vrot.slane %v1135, 1
      %v1294 = vsel %vm249, %v1291, %v1293
      %v1295 = vrot.slane %v1136, 1
      %v1296 = vrot.slane %v1137, 1
      %v1297 = vsel %vm249, %v1295, %v1296
      %v1298 = vrot.slane %v1138, 1
      %v1299 = vsel %vm249, %v1296, %v1298
      %v1300 = vrot.slane %v1139, 1
      %v1301 = vrot.slane %v1140, 1
      %v1302 = vsel %vm249, %v1300, %v1301
      %v1303 = vrot.slane %v1141, 1
      %v1304 = vsel %vm249, %v1301, %v1303
      %s1305 = scalar_lea.vmem %s1, 56
      %v1306 = vld [vmem:[%s1305] sm:$0xff]
      %v1307 = vsel %vm272, %v1287, 0
      %v1309 = vsel %vm272, %v1289, 0
      %v1311 = vsel %vm272, %v1292, 0
      %v1313 = vsel %vm272, %v1294, 0
      %v1315 = vsel %vm272, %v1297, 0
      %v1317 = vsel %vm272, %v1299, 0
      %v1319 = vsel %vm272, %v1302, 0
      %v1321 = vsel %vm272, %v1304, 0
      %1323 = vmatprep.subr.mxu0 0.0
      %1324 = vmatpush1.msra.mxu0 0.0
      %1325 = vmatprep.subr.mxu0 0.0
      %1326 = vmatpush1.msra.mxu0 0.0
      %1327 = vmatprep.subr.mxu0 0.0
      %1328 = vmatpush1.msra.mxu0 0.0
      %1329 = vmatprep.subr.mxu0 0.0
      %1330 = vmatpush1.msra.mxu0 0.0
      %1331 = vmatprep.subr.mxu0 0.0
      %1332 = vmatpush1.msra.mxu0 0.0
      %1333 = vmatprep.subr.mxu0 0.0
      %1334 = vmatpush1.msra.mxu0 0.0
      %1335 = vmatprep.subr.mxu0 0.0
      %1336 = vmatpush1.msra.mxu0 0.0
      %1337 = vmatprep.subr.mxu0 0.0
      %1338 = vmatpush1.msra.mxu0 0.0
      %1339 = vmatprep.subr.mxu0 0.0
      %1340 = vmatpush1.msra.mxu0 0.0
      %1341 = vmatprep.subr.mxu0 0.0
      %1342 = vmatpush1.msra.mxu0 0.0
      %1343 = vmatprep.subr.mxu0 0.0
      %1344 = vmatpush1.msra.mxu0 0.0
      %1345 = vmatprep.subr.mxu0 0.0
      %1346 = vmatpush1.msra.mxu0 0.0
      %1347 = vmatprep.subr.mxu0 0.0
      %1348 = vmatpush1.msra.mxu0 0.0
      %1349 = vmatprep.subr.mxu0 0.0
      %1350 = vmatpush1.msra.mxu0 0.0
      %1351 = vmatprep.subr.mxu0 0.0
      %1352 = vmatpush1.msra.mxu0 0.0
      %1353 = vmatprep.subr.mxu0 0.0
      %1354 = vmatpush1.msra.mxu0 %v1306
      %1355 = vmatprep.subr.mxu0 0.0
      %1356 = vmatpush2.msra.mxu0 0.0
      %1357 = vmatprep.subr.mxu0 0.0
      %1358 = vmatpush2.msra.mxu0 0.0
      %1359 = vmatprep.subr.mxu0 0.0
      %1360 = vmatpush2.msra.mxu0 0.0
      %1361 = vmatprep.subr.mxu0 0.0
      %1362 = vmatpush2.msra.mxu0 0.0
      %1363 = vmatprep.subr.mxu0 0.0
      %1364 = vmatpush2.msra.mxu0 0.0
      %1365 = vmatprep.subr.mxu0 0.0
      %1366 = vmatpush2.msra.mxu0 0.0
      %1367 = vmatprep.subr.mxu0 0.0
      %1368 = vmatpush2.msra.mxu0 0.0
      %1369 = vmatprep.subr.mxu0 0.0
      %1370 = vmatpush2.msra.mxu0 0.0
      %1371 = vmatprep.subr.mxu0 0.0
      %1372 = vmatpush2.msra.mxu0 0.0
      %1373 = vmatprep.subr.mxu0 0.0
      %1374 = vmatpush2.msra.mxu0 0.0
      %1375 = vmatprep.subr.mxu0 0.0
      %1376 = vmatpush2.msra.mxu0 0.0
      %1377 = vmatprep.subr.mxu0 0.0
      %1378 = vmatpush2.msra.mxu0 0.0
      %1379 = vmatprep.subr.mxu0 0.0
      %1380 = vmatpush2.msra.mxu0 0.0
      %1381 = vmatprep.subr.mxu0 0.0
      %1382 = vmatpush2.msra.mxu0 0.0
      %1383 = vmatprep.subr.mxu0 0.0
      %1384 = vmatpush2.msra.mxu0 0.0
      %1385 = vmatprep.subr.mxu0 0.0
      %1386 = vmatpush2.msra.mxu0 0.0
      %1387 = vmatprep.mubr.f32.mxu0 0.0
      %1388 = vmatmul.mubr.f32.gmra.mxu0 %v1307
      %v1389 = vpop.f32.mrf.mxu0
      %v1390 = vadd.f32 0.0, %v1389
      %v1391 = vpop.f32.mrf.mxu0
      %1392 = vmatprep.mubr.f32.mxu0 0.0
      %1393 = vmatmul.mubr.f32.gmra.mxu0 %v1309
      %v1394 = vpop.f32.mrf.mxu0
      %v1395 = vadd.f32 0.0, %v1394
      %v1396 = vpop.f32.mrf.mxu0
      %1397 = vmatprep.mubr.f32.mxu0 0.0
      %1398 = vmatmul.mubr.f32.gmra.mxu0 %v1311
      %v1399 = vpop.f32.mrf.mxu0
      %v1400 = vadd.f32 0.0, %v1399
      %v1401 = vpop.f32.mrf.mxu0
      %1402 = vmatprep.mubr.f32.mxu0 0.0
      %1403 = vmatmul.mubr.f32.gmra.mxu0 %v1313
      %v1404 = vpop.f32.mrf.mxu0
      %v1405 = vadd.f32 0.0, %v1404
      %v1406 = vpop.f32.mrf.mxu0
      %1407 = vmatprep.mubr.f32.mxu0 0.0
      %1408 = vmatmul.mubr.f32.gmra.mxu0 %v1315
      %v1409 = vpop.f32.mrf.mxu0
      %v1410 = vadd.f32 0.0, %v1409
      %v1411 = vpop.f32.mrf.mxu0
      %1412 = vmatprep.mubr.f32.mxu0 0.0
      %1413 = vmatmul.mubr.f32.gmra.mxu0 %v1317
      %v1414 = vpop.f32.mrf.mxu0
      %v1415 = vadd.f32 0.0, %v1414
      %v1416 = vpop.f32.mrf.mxu0
      %1417 = vmatprep.mubr.f32.mxu0 0.0
      %1418 = vmatmul.mubr.f32.gmra.mxu0 %v1319
      %v1419 = vpop.f32.mrf.mxu0
      %v1420 = vadd.f32 0.0, %v1419
      %v1421 = vpop.f32.mrf.mxu0
      %1422 = vmatprep.mubr.f32.mxu0 0.0
      %1423 = vmatmul.mubr.f32.gmra.mxu0 %v1321
      %v1424 = vpop.f32.mrf.mxu0
      %v1425 = vadd.f32 0.0, %v1424
      %v1426 = vpop.f32.mrf.mxu0
      %1427 = vdwg.mxu0
      %v1428 = vadd.f32 %v1273, %v1390
      %v1429 = vadd.f32 %v1274, %v1395
      %v1430 = vadd.f32 %v1275, %v1400
      %v1431 = vadd.f32 %v1276, %v1405
      %v1432 = vadd.f32 %v1277, %v1410
      %v1433 = vadd.f32 %v1278, %v1415
      %v1434 = vadd.f32 %v1279, %v1420
      %v1435 = vadd.f32 %v1280, %v1425
      %v1436 = vrot.slane %v1130, 2
      %v1437 = vrot.slane %v1131, 2
      %v1438 = vsel %vm515, %v1436, %v1437
      %v1439 = vrot.slane %v1132, 2
      %v1440 = vsel %vm515, %v1437, %v1439
      %v1441 = vrot.slane %v1133, 2
      %v1442 = vrot.slane %v1134, 2
      %v1443 = vsel %vm515, %v1441, %v1442
      %v1444 = vrot.slane %v1135, 2
      %v1445 = vsel %vm515, %v1442, %v1444
      %v1446 = vrot.slane %v1136, 2
      %v1447 = vrot.slane %v1137, 2
      %v1448 = vsel %vm515, %v1446, %v1447
      %v1449 = vrot.slane %v1138, 2
      %v1450 = vsel %vm515, %v1447, %v1449
      %v1451 = vrot.slane %v1139, 2
      %v1452 = vrot.slane %v1140, 2
      %v1453 = vsel %vm515, %v1451, %v1452
      %v1454 = vrot.slane %v1141, 2
      %v1455 = vsel %vm515, %v1452, %v1454
      %s1456 = scalar_lea.vmem %s1, 64
      %v1457 = vld [vmem:[%s1456] sm:$0xff]
      %v1458 = vsel %vm272, %v1438, 0
      %v1460 = vsel %vm272, %v1440, 0
      %v1462 = vsel %vm272, %v1443, 0
      %v1464 = vsel %vm272, %v1445, 0
      %v1466 = vsel %vm272, %v1448, 0
      %v1468 = vsel %vm272, %v1450, 0
      %v1470 = vsel %vm272, %v1453, 0
      %v1472 = vsel %vm272, %v1455, 0
      %1474 = vmatprep.subr.mxu0 0.0
      %1475 = vmatpush1.msra.mxu0 0.0
      %1476 = vmatprep.subr.mxu0 0.0
      %1477 = vmatpush1.msra.mxu0 0.0
      %1478 = vmatprep.subr.mxu0 0.0
      %1479 = vmatpush1.msra.mxu0 0.0
      %1480 = vmatprep.subr.mxu0 0.0
      %1481 = vmatpush1.msra.mxu0 0.0
      %1482 = vmatprep.subr.mxu0 0.0
      %1483 = vmatpush1.msra.mxu0 0.0
      %1484 = vmatprep.subr.mxu0 0.0
      %1485 = vmatpush1.msra.mxu0 0.0
      %1486 = vmatprep.subr.mxu0 0.0
      %1487 = vmatpush1.msra.mxu0 0.0
      %1488 = vmatprep.subr.mxu0 0.0
      %1489 = vmatpush1.msra.mxu0 0.0
      %1490 = vmatprep.subr.mxu0 0.0
      %1491 = vmatpush1.msra.mxu0 0.0
      %1492 = vmatprep.subr.mxu0 0.0
      %1493 = vmatpush1.msra.mxu0 0.0
      %1494 = vmatprep.subr.mxu0 0.0
      %1495 = vmatpush1.msra.mxu0 0.0
      %1496 = vmatprep.subr.mxu0 0.0
      %1497 = vmatpush1.msra.mxu0 0.0
      %1498 = vmatprep.subr.mxu0 0.0
      %1499 = vmatpush1.msra.mxu0 0.0
      %1500 = vmatprep.subr.mxu0 0.0
      %1501 = vmatpush1.msra.mxu0 0.0
      %1502 = vmatprep.subr.mxu0 0.0
      %1503 = vmatpush1.msra.mxu0 0.0
      %1504 = vmatprep.subr.mxu0 0.0
      %1505 = vmatpush1.msra.mxu0 %v1457
      %1506 = vmatprep.subr.mxu0 0.0
      %1507 = vmatpush2.msra.mxu0 0.0
      %1508 = vmatprep.subr.mxu0 0.0
      %1509 = vmatpush2.msra.mxu0 0.0
      %1510 = vmatprep.subr.mxu0 0.0
      %1511 = vmatpush2.msra.mxu0 0.0
      %1512 = vmatprep.subr.mxu0 0.0
      %1513 = vmatpush2.msra.mxu0 0.0
      %1514 = vmatprep.subr.mxu0 0.0
      %1515 = vmatpush2.msra.mxu0 0.0
      %1516 = vmatprep.subr.mxu0 0.0
      %1517 = vmatpush2.msra.mxu0 0.0
      %1518 = vmatprep.subr.mxu0 0.0
      %1519 = vmatpush2.msra.mxu0 0.0
      %1520 = vmatprep.subr.mxu0 0.0
      %1521 = vmatpush2.msra.mxu0 0.0
      %1522 = vmatprep.subr.mxu0 0.0
      %1523 = vmatpush2.msra.mxu0 0.0
      %1524 = vmatprep.subr.mxu0 0.0
      %1525 = vmatpush2.msra.mxu0 0.0
      %1526 = vmatprep.subr.mxu0 0.0
      %1527 = vmatpush2.msra.mxu0 0.0
      %1528 = vmatprep.subr.mxu0 0.0
      %1529 = vmatpush2.msra.mxu0 0.0
      %1530 = vmatprep.subr.mxu0 0.0
      %1531 = vmatpush2.msra.mxu0 0.0
      %1532 = vmatprep.subr.mxu0 0.0
      %1533 = vmatpush2.msra.mxu0 0.0
      %1534 = vmatprep.subr.mxu0 0.0
      %1535 = vmatpush2.msra.mxu0 0.0
      %1536 = vmatprep.subr.mxu0 0.0
      %1537 = vmatpush2.msra.mxu0 0.0
      %1538 = vmatprep.mubr.f32.mxu0 0.0
      %1539 = vmatmul.mubr.f32.gmra.mxu0 %v1458
      %v1540 = vpop.f32.mrf.mxu0
      %v1541 = vadd.f32 0.0, %v1540
      %v1542 = vpop.f32.mrf.mxu0
      %1543 = vmatprep.mubr.f32.mxu0 0.0
      %1544 = vmatmul.mubr.f32.gmra.mxu0 %v1460
      %v1545 = vpop.f32.mrf.mxu0
      %v1546 = vadd.f32 0.0, %v1545
      %v1547 = vpop.f32.mrf.mxu0
      %1548 = vmatprep.mubr.f32.mxu0 0.0
      %1549 = vmatmul.mubr.f32.gmra.mxu0 %v1462
      %v1550 = vpop.f32.mrf.mxu0
      %v1551 = vadd.f32 0.0, %v1550
      %v1552 = vpop.f32.mrf.mxu0
      %1553 = vmatprep.mubr.f32.mxu0 0.0
      %1554 = vmatmul.mubr.f32.gmra.mxu0 %v1464
      %v1555 = vpop.f32.mrf.mxu0
      %v1556 = vadd.f32 0.0, %v1555
      %v1557 = vpop.f32.mrf.mxu0
      %1558 = vmatprep.mubr.f32.mxu0 0.0
      %1559 = vmatmul.mubr.f32.gmra.mxu0 %v1466
      %v1560 = vpop.f32.mrf.mxu0
      %v1561 = vadd.f32 0.0, %v1560
      %v1562 = vpop.f32.mrf.mxu0
      %1563 = vmatprep.mubr.f32.mxu0 0.0
      %1564 = vmatmul.mubr.f32.gmra.mxu0 %v1468
      %v1565 = vpop.f32.mrf.mxu0
      %v1566 = vadd.f32 0.0, %v1565
      %v1567 = vpop.f32.mrf.mxu0
      %1568 = vmatprep.mubr.f32.mxu0 0.0
      %1569 = vmatmul.mubr.f32.gmra.mxu0 %v1470
      %v1570 = vpop.f32.mrf.mxu0
      %v1571 = vadd.f32 0.0, %v1570
      %v1572 = vpop.f32.mrf.mxu0
      %1573 = vmatprep.mubr.f32.mxu0 0.0
      %1574 = vmatmul.mubr.f32.gmra.mxu0 %v1472
      %v1575 = vpop.f32.mrf.mxu0
      %v1576 = vadd.f32 0.0, %v1575
      %v1577 = vpop.f32.mrf.mxu0
      %1578 = vdwg.mxu0
      %v1579 = vadd.f32 %v1428, %v1541
      %v1580 = vadd.f32 %v1429, %v1546
      %v1581 = vadd.f32 %v1430, %v1551
      %v1582 = vadd.f32 %v1431, %v1556
      %v1583 = vadd.f32 %v1432, %v1561
      %v1584 = vadd.f32 %v1433, %v1566
      %v1585 = vadd.f32 %v1434, %v1571
      %v1586 = vadd.f32 %v1435, %v1576
      %v1587 = vld [vmem:[%s2] sm:$0x1]
      %v1589 = vlaneseq
      %v1590 = vshrl.u32 %v1589, 7
      %v1591 = vsub.s32 0, %v1590
      %v1592 = vrot.slane %v1587, %v1591
      %v1594 = vadd.f32 %v1579, %v1592
      %v1595 = vadd.f32 %v1580, %v1592
      %v1596 = vadd.f32 %v1581, %v1592
      %v1597 = vadd.f32 %v1582, %v1592
      %v1598 = vadd.f32 %v1583, %v1592
      %v1599 = vadd.f32 %v1584, %v1592
      %v1600 = vadd.f32 %v1585, %v1592
      %v1601 = vadd.f32 %v1586, %v1592
      %vm1602 = vcmp.gt.f32.partialorder %v1594, 0.0
      %vm1603 = vcmp.gt.f32.partialorder %v1595, 0.0
      %vm1604 = vcmp.gt.f32.partialorder %v1596, 0.0
      %vm1605 = vcmp.gt.f32.partialorder %v1597, 0.0
      %vm1606 = vcmp.gt.f32.partialorder %v1598, 0.0
      %vm1607 = vcmp.gt.f32.partialorder %v1599, 0.0
      %vm1608 = vcmp.gt.f32.partialorder %v1600, 0.0
      %vm1609 = vcmp.gt.f32.partialorder %v1601, 0.0
      %v1610 = vld [vmem:[%s3] sm:$0x1]
      %v1612 = vlaneseq
      %v1613 = vshrl.u32 %v1612, 7
      %v1614 = vsub.s32 0, %v1613
      %v1615 = vrot.slane %v1610, %v1614
      %v1617 = vmul.f32 %v1594, %v1615
      %v1618 = vmul.f32 %v1595, %v1615
      %v1619 = vmul.f32 %v1596, %v1615
      %v1620 = vmul.f32 %v1597, %v1615
      %v1621 = vmul.f32 %v1598, %v1615
      %v1622 = vmul.f32 %v1599, %v1615
      %v1623 = vmul.f32 %v1600, %v1615
      %v1624 = vmul.f32 %v1601, %v1615
      %v1625 = vsel %vm1602, %v1594, %v1617
      %v1626 = vsel %vm1603, %v1595, %v1618
      %v1627 = vsel %vm1604, %v1596, %v1619
      %v1628 = vsel %vm1605, %v1597, %v1620
      %v1629 = vsel %vm1606, %v1598, %v1621
      %v1630 = vsel %vm1607, %v1599, %v1622
      %v1631 = vsel %vm1608, %v1600, %v1623
      %v1632 = vsel %vm1609, %v1601, %v1624
      %vm1633 = vcmask 130048
      %1634 = vst.msk [vmem:[%s219] sm:$0xff] %vm1633, %v1625
      %1635 = vst.msk [vmem:[%s219 + $0x8] sm:$0xff] %vm1633, %v1626
      %1636 = vst.msk [vmem:[%s219 + $0x10] sm:$0xff] %vm1633, %v1627
      %1637 = vst.msk [vmem:[%s219 + $0x18] sm:$0xff] %vm1633, %v1628
      %1638 = vst.msk [vmem:[%s219 + $0x20] sm:$0xff] %vm1633, %v1629
      %1639 = vst.msk [vmem:[%s219 + $0x28] sm:$0xff] %vm1633, %v1630
      %1640 = vst.msk [vmem:[%s219 + $0x30] sm:$0xff] %vm1633, %v1631
      %1641 = vst.msk [vmem:[%s219 + $0x38] sm:$0xff] %vm1633, %v1632
      %s1642 = smul.u32 8, %s20
      %p1643 = scmp.lt.s32.totalorder %s19, 1
      %s1644 = scalar_select %p1643, %s19, 1
      %p1645 = scmp.lt.s32.totalorder %s1642, 31
      %s1646 = scalar_select %p1645, %s1642, 31
      %s1647 = smul.addr %s1644, 32
      %s1648 = sadd.s32 %s1646, %s1647
      %s1649 = smul.addr %s1648, 8
      %s1650 = scalar_lea.vmem %s4, %s1649
      // Predicated region
      $region37: #{tpu_custom_call.1} parent=35 // pred_check
        %p1651 = pneg %p136
      $region38: #{tpu_custom_call.1} parent=35 // pred_check_branch
        %1653 = sbr.rel (%p1651) target = $region40
      $region39: #{tpu_custom_call.1} parent=35 // pred_region
        %s1654 = smul.u32 8, %s20
      $region40: #{tpu_custom_call.1} parent=35 // pred_fallthru
        _
    $region36: #{tpu_custom_call.1} parent=5 // pred_fallthru
      _
    %p1655 = scmp.le.s32.totalorder 2, %s10
    // Predicated region
    $region41: #{tpu_custom_call.1} parent=5 // pred_check
      %p1656 = pneg %p1655
    $region42: #{tpu_custom_call.1} parent=5 // pred_check_branch
      %1658 = sbr.rel (%p1656) target = $region44
    $region43: #{tpu_custom_call.1} parent=5 // pred_region
      %s1659 = ssub.s32 %s10, 2
      // Predicated region
      $region45: #{tpu_custom_call.1} parent=43 // pred_check
        %p1660 = pneg %p142
      $region46: #{tpu_custom_call.1} parent=43 // pred_check_branch
        %1662 = sbr.rel (%p1660) target = $region48
      $region47: #{tpu_custom_call.1} parent=43 // pred_region
        %s1663 = smul.u32 8, %s22
        %p1664 = scmp.lt.s32.totalorder %s21, 1
        %s1665 = scalar_select %p1664, %s21, 1
        %p1666 = scmp.lt.s32.totalorder %s1663, 31
        %s1667 = scalar_select %p1666, %s1663, 31
        %s1668 = smul.addr %s1665, 32
        %s1669 = sadd.s32 %s1667, %s1668
        %s1670 = smul.addr %s1669, 8
        %s1671 = scalar_lea.vmem %s4, %s1670
      $region48: #{tpu_custom_call.1} parent=43 // pred_fallthru
        _
    $region44: #{tpu_custom_call.1} parent=5 // pred_fallthru
      _
  $region6: #{tpu_custom_call.1} parent=0 // loop_footer
    %s14 = sadd.s32 1, %s10
  $region7: #{tpu_custom_call.1} parent=0 // loop_footer_branch
    %9 = sbr.rel target = $region3
  $region8: #{tpu_custom_call.1} parent=0 // loop_exit
    _

</llo_original>
